<compile_context>
chip_gen: v6e
topology: v6e:2x2x1
jax: 0.10.0
libtpu: 0.0.40
codegen_flags: <defaults>
</compile_context>

<pallas_src>
import jax
import jax.numpy as jnp
from jax.experimental import pallas as pl
from jax.experimental.pallas import tpu as pltpu


def sparse_fusion_kernel(x_ref, wbd_ref, o_ref):
    # x_ref  : (TILE_B, C*K) f32  -- natural row-major batch tile of x
    # wbd_ref: (C*K, C)      f32  -- block-diagonal fused weight (W * W2), resident
    # o_ref  : (TILE_B, C)   f32  -- output tile in natural (batch, class) order
    # d[b, c] = sum_k x[b, c*K + k] * W[k, c] * W2[c]   (eye-mask + diag + W2 fused)
    d = jnp.dot(
        x_ref[...], wbd_ref[...],
        preferred_element_type=jnp.float32,
        precision=jax.lax.Precision.HIGHEST,   # ~f32-exact MXU accumulation
    )                                          # (TILE_B, C)

    # Numerically stable softmax over the class axis (C = 5).
    m = jnp.max(d, axis=-1, keepdims=True)
    e = jnp.exp(d - m)
    s = jnp.sum(e, axis=-1, keepdims=True)
    o_ref[...] = (e * pl.reciprocal(s, approx=False)).astype(o_ref.dtype)


def sparse_fusion(x, W, W2, *, tile_b=8192):
    """x: (B, C, K) f32, W: (K, C) f32, W2: (C,) f32 -> (B, C) softmax probs."""
    B, C, K = x.shape
    assert W.shape == (K, C) and W2.shape == (C,)
    assert tile_b % 128 == 0

    # Free layout op: merging contiguous trailing dims is a bitcast-level reshape.
    xf = x.reshape(B, C * K).astype(jnp.float32)                     # (B, 45)

    # Host-built fused block-diagonal weight (tiny: 45*5 floats):
    #   wbd[c*K + k, c] = W[k, c] * W2[c],  zero elsewhere.
    wf_t = (W.astype(jnp.float32) * W2.astype(jnp.float32)[None, :]).T        # (C, K)
    wbd = (wf_t[:, :, None] * jnp.eye(C, dtype=jnp.float32)[:, None, :])      # (C, K, C)
    wbd = wbd.reshape(C * K, C)                                                # (45, 5)

    if B <= tile_b:
        tb, n_tiles = B, 1            # single exact block, any B (no padding at all)
    else:
        tb = tile_b                   # multiple of 128; last block may be ragged —
        n_tiles = pl.cdiv(B, tb)      # Pallas clamps edge DMAs, drops OOB writes.

    out = pl.pallas_call(
        sparse_fusion_kernel,
        out_shape=jax.ShapeDtypeStruct((B, C), jnp.float32),
        grid=(n_tiles,),
        in_specs=[
            # x: tile only the batch (row) axis; each block is contiguous in HBM.
            pl.BlockSpec((tb, C * K), lambda i: (i, 0)),
            # fused weight: same tiny block every step -> stays resident in VMEM.
            pl.BlockSpec((C * K, C), lambda i: (0, 0)),
        ],
        out_specs=pl.BlockSpec((tb, C), lambda i: (i, 0)),
        compiler_params=pltpu.CompilerParams(
            dimension_semantics=("parallel",),      # v7x: shard steps over 2 TCs
            vmem_limit_bytes=32 * 1024 * 1024,      # headroom for 8192-row tiles
        ),
    )(xf, wbd)
    return out                                                        # (B, C)


def sparse_fusion_ref(x, W, W2):
    """Pure-JAX reference mirroring the PyTorch forward op-for-op."""
    C = W.shape[1]
    xw = jnp.matmul(x, W, precision=jax.lax.Precision.HIGHEST)   # (B, C, C)
    xw = xw * jnp.eye(C, dtype=x.dtype)                          # mask off-diagonal
    d = jnp.diagonal(xw, axis1=-1, axis2=-2)                     # (B, C)
    return jax.nn.softmax(d * W2, axis=1)


if __name__ == "__main__":
    n_classes, K = 5, 9     # fixed by the module's (9, 5) weight and eye(5)

    key = jax.random.PRNGKey(0)
    kx, kw, kw2, kx2 = jax.random.split(key, 4)

    # Deterministic "randn"-style parameter init (synthetic, no checkpoint).
    W = jax.random.normal(kw, (K, n_classes), dtype=jnp.float32)
    W2 = jax.random.normal(kw2, (n_classes,), dtype=jnp.float32)

    # Case 1: small batch -> single exact block (no padding anywhere).
    x = jax.random.normal(kx, (200, n_classes, K), dtype=jnp.float32)
    out = jax.block_until_ready(sparse_fusion(x, W, W2))
    ref = sparse_fusion_ref(x, W, W2)
    assert out.shape == (200, n_classes)
    assert jnp.allclose(out, ref, atol=1e-5, rtol=1e-5), "mismatch vs reference (case 1)"

    # Case 2: multi-tile grid with a ragged last block (exercises the no-pad path).
    x2 = jax.random.normal(kx2, (300, n_classes, K), dtype=jnp.float32)
    out2 = jax.block_until_ready(sparse_fusion(x2, W, W2, tile_b=128))
    ref2 = sparse_fusion_ref(x2, W, W2)
    assert out2.shape == (300, n_classes)
    assert jnp.allclose(out2, ref2, atol=1e-5, rtol=1e-5), "mismatch vs reference (case 2)"

    print("KERNEL_OK")
</pallas_src>

<mosaic_0001>
module attributes {stable_mosaic.version = 11 : i64} {
  func.func @sparse_fusion_kernel(%arg0: i32, %arg1: memref<200x45xf32, #tpu.memory_space<vmem>>, %arg2: memref<45x5xf32, #tpu.memory_space<vmem>>, %arg3: memref<200x5xf32, #tpu.memory_space<vmem>>) attributes {dimension_semantics = [#tpu.dimension_semantics<parallel>], iteration_bounds = array<i64: 1>, scalar_prefetch = 0 : i64, scratch_operands = 0 : i64, tpu.core_type = #tpu.core_type<tc>, window_params = [{transform_indices = @transform_0, window_bounds = array<i64: 200, 45>}, {pipeline_mode = #tpu.pipeline_mode<synchronous>, transform_indices = @transform_1, window_bounds = array<i64: 45, 5>}, {transform_indices = @transform_2, window_bounds = array<i64: 200, 5>}]} {
    %c0 = arith.constant 0 : index
    %c0_0 = arith.constant 0 : index
    %0 = vector.load %arg1[%c0, %c0_0] : memref<200x45xf32, #tpu.memory_space<vmem>>, vector<200x45xf32>
    %c0_1 = arith.constant 0 : index
    %c0_2 = arith.constant 0 : index
    %1 = vector.load %arg2[%c0_1, %c0_2] : memref<45x5xf32, #tpu.memory_space<vmem>>, vector<45x5xf32>
    %cst = arith.constant dense<0.000000e+00> : vector<200x5xf32>
    %2 = tpu.matmul %0, %1, %cst {dimension_numbers = #tpu.dot_dimension_numbers<[1], [0], [0], [1], [0, 0, 1, 1], [], []>, precision = #tpu.contract_precision<fp32>} : vector<200x45xf32>, vector<45x5xf32>, vector<200x5xf32> -> vector<200x5xf32>
    %cst_3 = arith.constant dense<0xFF800000> : vector<200xf32>
    %3 = vector.multi_reduction <maximumf>, %2, %cst_3 [1] : vector<200x5xf32> to vector<200xf32>
    %4 = vector.shape_cast %3 : vector<200xf32> to vector<200x1xf32>
    %5 = vector.broadcast %4 : vector<200x1xf32> to vector<200x5xf32>
    %6 = arith.subf %2, %5 : vector<200x5xf32>
    %7 = math.exp %6 : vector<200x5xf32>
    %cst_4 = arith.constant dense<0.000000e+00> : vector<200xf32>
    %8 = vector.multi_reduction <add>, %7, %cst_4 [1] : vector<200x5xf32> to vector<200xf32>
    %9 = vector.shape_cast %8 : vector<200xf32> to vector<200x1xf32>
    %10 = tpu.reciprocal %9 : vector<200x1xf32> -> vector<200x1xf32>
    %11 = vector.broadcast %10 : vector<200x1xf32> to vector<200x5xf32>
    %12 = arith.mulf %7, %11 : vector<200x5xf32>
    %c0_5 = arith.constant 0 : index
    %c0_6 = arith.constant 0 : index
    %13 = vector.load %arg3[%c0_5, %c0_6] : memref<200x5xf32, #tpu.memory_space<vmem>>, vector<200x5xf32>
    tpu.vector_store %arg3[%c0_5, %c0_6], %12 {strides = array<i32>} : memref<200x5xf32, #tpu.memory_space<vmem>>, vector<200x5xf32>,
    return
  }
  func.func @transform_0(%arg0: i32) -> (i32, i32) {
    %c0_i32 = arith.constant 0 : i32
    %c0_i32_0 = arith.constant 0 : i32
    return %arg0, %c0_i32 : i32, i32
  }
  func.func @transform_1(%arg0: i32) -> (i32, i32) {
    %c0_i32 = arith.constant 0 : i32
    %c0_i32_0 = arith.constant 0 : i32
    %c0_i32_1 = arith.constant 0 : i32
    return %c0_i32, %c0_i32_0 : i32, i32
  }
  func.func @transform_2(%arg0: i32) -> (i32, i32) {
    %c0_i32 = arith.constant 0 : i32
    %c0_i32_0 = arith.constant 0 : i32
    return %arg0, %c0_i32 : i32, i32
  }
}

</mosaic_0001>

<llo_original>
// kernel: tpu_custom_call.1
$region0: #{tpu_custom_call.1}
  #allocation0 [shape = 'u32[]', space=smem, size = 0x4, offset = 0x4, fixed_abs, tag = 'smem constant byte address 0x4 - core index']
  #allocation1 [shape = 'u32[144,128]{1,0:T(1,128)}', space=vmem, size = 0x12000, scoped, tag = 'internal scratch']
  %s0 = inlined_call_operand.vmem [shape: f32[200,45], index: 0, kind: input, shape index: {}]
  %s1 = inlined_call_operand.vmem [shape: f32[45,5], index: 1, kind: input, shape index: {}]
  %s2 = inlined_call_operand.vmem [shape: f32[200,5], index: 2, kind: output, shape index: {}]
  %s3 = sld [smem:[#allocation0]]
  $region18: #{tpu_custom_call.1} parent=0
    _
  %s5 = ssub.s32 1, %s3
  %s6 = scalar_select 0, %s5, %s3
  // Predicated region
  $region2: #{tpu_custom_call.1} parent=0 // pred_check
    _
  $region3: #{tpu_custom_call.1} parent=0 // pred_check_branch
    %8 = sbr.rel (0) target = $region5
  $region4: #{tpu_custom_call.1} parent=0 // pred_region
    _
  $region5: #{tpu_custom_call.1} parent=0 // pred_fallthru
    _
  // Predicated region
  $region6: #{tpu_custom_call.1} parent=0 // pred_check
    _
  $region7: #{tpu_custom_call.1} parent=0 // pred_check_branch
    %10 = sbr.rel (0) target = $region9
  $region8: #{tpu_custom_call.1} parent=0 // pred_region
    _
  $region9: #{tpu_custom_call.1} parent=0 // pred_fallthru
    _
  %v11 = vld [vmem:[%s0] sm:$0xff]
  %v12 = vld [vmem:[%s0 + $0x8] sm:$0xff]
  %v13 = vld [vmem:[%s0 + $0x10] sm:$0xff]
  %v14 = vld [vmem:[%s0 + $0x18] sm:$0xff]
  %v15 = vld [vmem:[%s0 + $0x20] sm:$0xff]
  %v16 = vld [vmem:[%s0 + $0x28] sm:$0xff]
  %v17 = vld [vmem:[%s0 + $0x30] sm:$0xff]
  %v18 = vld [vmem:[%s0 + $0x38] sm:$0xff]
  %v19 = vld [vmem:[%s0 + $0x40] sm:$0xff]
  %v20 = vld [vmem:[%s0 + $0x48] sm:$0xff]
  %v21 = vld [vmem:[%s0 + $0x50] sm:$0xff]
  %v22 = vld [vmem:[%s0 + $0x58] sm:$0xff]
  %v23 = vld [vmem:[%s0 + $0x60] sm:$0xff]
  %v24 = vld [vmem:[%s0 + $0x68] sm:$0xff]
  %v25 = vld [vmem:[%s0 + $0x70] sm:$0xff]
  %v26 = vld [vmem:[%s0 + $0x78] sm:$0xff]
  %v27 = vld [vmem:[%s0 + $0x80] sm:$0xff]
  %v28 = vld [vmem:[%s0 + $0x88] sm:$0xff]
  %v29 = vld [vmem:[%s0 + $0x90] sm:$0xff]
  %v30 = vld [vmem:[%s0 + $0x98] sm:$0xff]
  %v31 = vld [vmem:[%s0 + $0xa0] sm:$0xff]
  %v32 = vld [vmem:[%s0 + $0xa8] sm:$0xff]
  %v33 = vld [vmem:[%s0 + $0xb0] sm:$0xff]
  %v34 = vld [vmem:[%s0 + $0xb8] sm:$0xff]
  %v35 = vld [vmem:[%s0 + $0xc0] sm:$0xff]
  %v36 = vld [vmem:[%s1] sm:$0xff]
  %v37 = vld [vmem:[%s1 + $0x8] sm:$0xff]
  %v38 = vld [vmem:[%s1 + $0x10] sm:$0xff]
  %v39 = vld [vmem:[%s1 + $0x18] sm:$0xff]
  %v40 = vld [vmem:[%s1 + $0x20] sm:$0xff]
  %v41 = vld [vmem:[%s1 + $0x28] sm:$0x1f]
  %vm42 = vcmask 367616
  %v44 = vsel %vm42, %v11, 0
  %v47 = vsel %vm42, %v12, 0
  %v50 = vsel %vm42, %v13, 0
  %v53 = vsel %vm42, %v14, 0
  %v56 = vsel %vm42, %v15, 0
  %v59 = vsel %vm42, %v16, 0
  %v62 = vsel %vm42, %v17, 0
  %v65 = vsel %vm42, %v18, 0
  %v68 = vsel %vm42, %v19, 0
  %v71 = vsel %vm42, %v20, 0
  %v74 = vsel %vm42, %v21, 0
  %v77 = vsel %vm42, %v22, 0
  %v80 = vsel %vm42, %v23, 0
  %v83 = vsel %vm42, %v24, 0
  %v86 = vsel %vm42, %v25, 0
  %v89 = vsel %vm42, %v26, 0
  %v92 = vsel %vm42, %v27, 0
  %v95 = vsel %vm42, %v28, 0
  %v98 = vsel %vm42, %v29, 0
  %v101 = vsel %vm42, %v30, 0
  %v104 = vsel %vm42, %v31, 0
  %v107 = vsel %vm42, %v32, 0
  %v110 = vsel %vm42, %v33, 0
  %v113 = vsel %vm42, %v34, 0
  %v116 = vsel %vm42, %v35, 0
  %vm118 = vcmask 1044480
  %v120 = vsel %vm118, %v41, 0
  %122 = vmatprep.subr.mxu0 0.0
  %123 = vmatpush1.msra.mxu0 0.0
  %124 = vmatprep.subr.mxu0 0.0
  %125 = vmatpush1.msra.mxu0 0.0
  %126 = vmatprep.subr.mxu0 0.0
  %127 = vmatpush1.msra.mxu0 0.0
  %128 = vmatprep.subr.mxu0 0.0
  %129 = vmatpush1.msra.mxu0 0.0
  %130 = vmatprep.subr.mxu0 0.0
  %131 = vmatpush1.msra.mxu0 0.0
  %132 = vmatprep.subr.mxu0 0.0
  %133 = vmatpush1.msra.mxu0 0.0
  %134 = vmatprep.subr.mxu0 0.0
  %135 = vmatpush1.msra.mxu0 0.0
  %136 = vmatprep.subr.mxu0 0.0
  %137 = vmatpush1.msra.mxu0 0.0
  %138 = vmatprep.subr.mxu0 0.0
  %139 = vmatpush1.msra.mxu0 0.0
  %140 = vmatprep.subr.mxu0 0.0
  %141 = vmatpush1.msra.mxu0 0.0
  %142 = vmatprep.subr.mxu0 0.0
  %v143 = vand.u32 %v120, 4294901760
  %144 = vmatpush1.msra.mxu0 %v143
  %145 = vmatprep.subr.mxu0 0.0
  %v146 = vand.u32 %v40, 4294901760
  %147 = vmatpush1.msra.mxu0 %v146
  %148 = vmatprep.subr.mxu0 0.0
  %v149 = vand.u32 %v39, 4294901760
  %150 = vmatpush1.msra.mxu0 %v149
  %151 = vmatprep.subr.mxu0 0.0
  %v152 = vand.u32 %v38, 4294901760
  %153 = vmatpush1.msra.mxu0 %v152
  %154 = vmatprep.subr.mxu0 0.0
  %v155 = vand.u32 %v37, 4294901760
  %156 = vmatpush1.msra.mxu0 %v155
  %157 = vmatprep.subr.mxu0 0.0
  %v158 = vand.u32 %v36, 4294901760
  %159 = vmatpush1.msra.mxu0 %v158
  %160 = vmatprep.subr.mxu0 0.0
  %161 = vmatpush2.msra.mxu0 0.0
  %162 = vmatprep.subr.mxu0 0.0
  %163 = vmatpush2.msra.mxu0 0.0
  %164 = vmatprep.subr.mxu0 0.0
  %165 = vmatpush2.msra.mxu0 0.0
  %166 = vmatprep.subr.mxu0 0.0
  %167 = vmatpush2.msra.mxu0 0.0
  %168 = vmatprep.subr.mxu0 0.0
  %169 = vmatpush2.msra.mxu0 0.0
  %170 = vmatprep.subr.mxu0 0.0
  %171 = vmatpush2.msra.mxu0 0.0
  %172 = vmatprep.subr.mxu0 0.0
  %173 = vmatpush2.msra.mxu0 0.0
  %174 = vmatprep.subr.mxu0 0.0
  %175 = vmatpush2.msra.mxu0 0.0
  %176 = vmatprep.subr.mxu0 0.0
  %177 = vmatpush2.msra.mxu0 0.0
  %178 = vmatprep.subr.mxu0 0.0
  %179 = vmatpush2.msra.mxu0 0.0
  %180 = vmatprep.subr.mxu0 0.0
  %181 = vmatpush2.msra.mxu0 0.0
  %182 = vmatprep.subr.mxu0 0.0
  %183 = vmatpush2.msra.mxu0 0.0
  %184 = vmatprep.subr.mxu0 0.0
  %185 = vmatpush2.msra.mxu0 0.0
  %186 = vmatprep.subr.mxu0 0.0
  %187 = vmatpush2.msra.mxu0 0.0
  %188 = vmatprep.subr.mxu0 0.0
  %189 = vmatpush2.msra.mxu0 0.0
  %190 = vmatprep.subr.mxu0 0.0
  %191 = vmatpush2.msra.mxu0 0.0
  %192 = vmatprep.mubr.f32.mxu0 0.0
  %v193 = vand.u32 %v44, 4294901760
  %v194 = vsub.f32 %v44, %v193
  %v195 = vand.u32 %v194, 4294901760
  %v196 = vsub.f32 %v194, %v195
  %v197 = vand.u32 %v196, 4294901760
  %198 = vmatmul.mubr.f32.gmra.mxu0 %v197
  %v199 = vpop.f32.mrf.mxu0
  %v200 = vadd.f32 0.0, %v199
  %v201 = vpop.f32.mrf.mxu0
  %202 = vmatprep.mubr.f32.mxu0 0.0
  %v203 = vand.u32 %v47, 4294901760
  %v204 = vsub.f32 %v47, %v203
  %v205 = vand.u32 %v204, 4294901760
  %v206 = vsub.f32 %v204, %v205
  %v207 = vand.u32 %v206, 4294901760
  %208 = vmatmul.mubr.f32.gmra.mxu0 %v207
  %v209 = vpop.f32.mrf.mxu0
  %v210 = vadd.f32 0.0, %v209
  %v211 = vpop.f32.mrf.mxu0
  %212 = vmatprep.mubr.f32.mxu0 0.0
  %v213 = vand.u32 %v50, 4294901760
  %v214 = vsub.f32 %v50, %v213
  %v215 = vand.u32 %v214, 4294901760
  %v216 = vsub.f32 %v214, %v215
  %v217 = vand.u32 %v216, 4294901760
  %218 = vmatmul.mubr.f32.gmra.mxu0 %v217
  %v219 = vpop.f32.mrf.mxu0
  %v220 = vadd.f32 0.0, %v219
  %v221 = vpop.f32.mrf.mxu0
  %222 = vmatprep.mubr.f32.mxu0 0.0
  %v223 = vand.u32 %v53, 4294901760
  %v224 = vsub.f32 %v53, %v223
  %v225 = vand.u32 %v224, 4294901760
  %v226 = vsub.f32 %v224, %v225
  %v227 = vand.u32 %v226, 4294901760
  %228 = vmatmul.mubr.f32.gmra.mxu0 %v227
  %v229 = vpop.f32.mrf.mxu0
  %v230 = vadd.f32 0.0, %v229
  %v231 = vpop.f32.mrf.mxu0
  %232 = vmatprep.mubr.f32.mxu0 0.0
  %v233 = vand.u32 %v56, 4294901760
  %v234 = vsub.f32 %v56, %v233
  %v235 = vand.u32 %v234, 4294901760
  %v236 = vsub.f32 %v234, %v235
  %v237 = vand.u32 %v236, 4294901760
  %238 = vmatmul.mubr.f32.gmra.mxu0 %v237
  %v239 = vpop.f32.mrf.mxu0
  %v240 = vadd.f32 0.0, %v239
  %v241 = vpop.f32.mrf.mxu0
  %242 = vmatprep.mubr.f32.mxu0 0.0
  %v243 = vand.u32 %v59, 4294901760
  %v244 = vsub.f32 %v59, %v243
  %v245 = vand.u32 %v244, 4294901760
  %v246 = vsub.f32 %v244, %v245
  %v247 = vand.u32 %v246, 4294901760
  %248 = vmatmul.mubr.f32.gmra.mxu0 %v247
  %v249 = vpop.f32.mrf.mxu0
  %v250 = vadd.f32 0.0, %v249
  %v251 = vpop.f32.mrf.mxu0
  %252 = vmatprep.mubr.f32.mxu0 0.0
  %v253 = vand.u32 %v62, 4294901760
  %v254 = vsub.f32 %v62, %v253
  %v255 = vand.u32 %v254, 4294901760
  %v256 = vsub.f32 %v254, %v255
  %v257 = vand.u32 %v256, 4294901760
  %258 = vmatmul.mubr.f32.gmra.mxu0 %v257
  %v259 = vpop.f32.mrf.mxu0
  %v260 = vadd.f32 0.0, %v259
  %v261 = vpop.f32.mrf.mxu0
  %262 = vmatprep.mubr.f32.mxu0 0.0
  %v263 = vand.u32 %v65, 4294901760
  %v264 = vsub.f32 %v65, %v263
  %v265 = vand.u32 %v264, 4294901760
  %v266 = vsub.f32 %v264, %v265
  %v267 = vand.u32 %v266, 4294901760
  %268 = vmatmul.mubr.f32.gmra.mxu0 %v267
  %v269 = vpop.f32.mrf.mxu0
  %v270 = vadd.f32 0.0, %v269
  %v271 = vpop.f32.mrf.mxu0
  %272 = vmatprep.mubr.f32.mxu0 0.0
  %v273 = vand.u32 %v68, 4294901760
  %v274 = vsub.f32 %v68, %v273
  %v275 = vand.u32 %v274, 4294901760
  %v276 = vsub.f32 %v274, %v275
  %v277 = vand.u32 %v276, 4294901760
  %278 = vmatmul.mubr.f32.gmra.mxu0 %v277
  %v279 = vpop.f32.mrf.mxu0
  %v280 = vadd.f32 0.0, %v279
  %v281 = vpop.f32.mrf.mxu0
  %282 = vmatprep.mubr.f32.mxu0 0.0
  %v283 = vand.u32 %v71, 4294901760
  %v284 = vsub.f32 %v71, %v283
  %v285 = vand.u32 %v284, 4294901760
  %v286 = vsub.f32 %v284, %v285
  %v287 = vand.u32 %v286, 4294901760
  %288 = vmatmul.mubr.f32.gmra.mxu0 %v287
  %v289 = vpop.f32.mrf.mxu0
  %v290 = vadd.f32 0.0, %v289
  %v291 = vpop.f32.mrf.mxu0
  %292 = vmatprep.mubr.f32.mxu0 0.0
  %v293 = vand.u32 %v74, 4294901760
  %v294 = vsub.f32 %v74, %v293
  %v295 = vand.u32 %v294, 4294901760
  %v296 = vsub.f32 %v294, %v295
  %v297 = vand.u32 %v296, 4294901760
  %298 = vmatmul.mubr.f32.gmra.mxu0 %v297
  %v299 = vpop.f32.mrf.mxu0
  %v300 = vadd.f32 0.0, %v299
  %v301 = vpop.f32.mrf.mxu0
  %302 = vmatprep.mubr.f32.mxu0 0.0
  %v303 = vand.u32 %v77, 4294901760
  %v304 = vsub.f32 %v77, %v303
  %v305 = vand.u32 %v304, 4294901760
  %v306 = vsub.f32 %v304, %v305
  %v307 = vand.u32 %v306, 4294901760
  %308 = vmatmul.mubr.f32.gmra.mxu0 %v307
  %v309 = vpop.f32.mrf.mxu0
  %v310 = vadd.f32 0.0, %v309
  %v311 = vpop.f32.mrf.mxu0
  %312 = vmatprep.mubr.f32.mxu0 0.0
  %v313 = vand.u32 %v80, 4294901760
  %v314 = vsub.f32 %v80, %v313
  %v315 = vand.u32 %v314, 4294901760
  %v316 = vsub.f32 %v314, %v315
  %v317 = vand.u32 %v316, 4294901760
  %318 = vmatmul.mubr.f32.gmra.mxu0 %v317
  %v319 = vpop.f32.mrf.mxu0
  %v320 = vadd.f32 0.0, %v319
  %v321 = vpop.f32.mrf.mxu0
  %322 = vmatprep.mubr.f32.mxu0 0.0
  %v323 = vand.u32 %v83, 4294901760
  %v324 = vsub.f32 %v83, %v323
  %v325 = vand.u32 %v324, 4294901760
  %v326 = vsub.f32 %v324, %v325
  %v327 = vand.u32 %v326, 4294901760
  %328 = vmatmul.mubr.f32.gmra.mxu0 %v327
  %v329 = vpop.f32.mrf.mxu0
  %v330 = vadd.f32 0.0, %v329
  %v331 = vpop.f32.mrf.mxu0
  %332 = vmatprep.mubr.f32.mxu0 0.0
  %v333 = vand.u32 %v86, 4294901760
  %v334 = vsub.f32 %v86, %v333
  %v335 = vand.u32 %v334, 4294901760
  %v336 = vsub.f32 %v334, %v335
  %v337 = vand.u32 %v336, 4294901760
  %338 = vmatmul.mubr.f32.gmra.mxu0 %v337
  %v339 = vpop.f32.mrf.mxu0
  %v340 = vadd.f32 0.0, %v339
  %v341 = vpop.f32.mrf.mxu0
  %342 = vmatprep.mubr.f32.mxu0 0.0
  %v343 = vand.u32 %v89, 4294901760
  %v344 = vsub.f32 %v89, %v343
  %v345 = vand.u32 %v344, 4294901760
  %v346 = vsub.f32 %v344, %v345
  %v347 = vand.u32 %v346, 4294901760
  %348 = vmatmul.mubr.f32.gmra.mxu0 %v347
  %v349 = vpop.f32.mrf.mxu0
  %v350 = vadd.f32 0.0, %v349
  %v351 = vpop.f32.mrf.mxu0
  %352 = vmatprep.mubr.f32.mxu0 0.0
  %v353 = vand.u32 %v92, 4294901760
  %v354 = vsub.f32 %v92, %v353
  %v355 = vand.u32 %v354, 4294901760
  %v356 = vsub.f32 %v354, %v355
  %v357 = vand.u32 %v356, 4294901760
  %358 = vmatmul.mubr.f32.gmra.mxu0 %v357
  %v359 = vpop.f32.mrf.mxu0
  %v360 = vadd.f32 0.0, %v359
  %v361 = vpop.f32.mrf.mxu0
  %362 = vmatprep.mubr.f32.mxu0 0.0
  %v363 = vand.u32 %v95, 4294901760
  %v364 = vsub.f32 %v95, %v363
  %v365 = vand.u32 %v364, 4294901760
  %v366 = vsub.f32 %v364, %v365
  %v367 = vand.u32 %v366, 4294901760
  %368 = vmatmul.mubr.f32.gmra.mxu0 %v367
  %v369 = vpop.f32.mrf.mxu0
  %v370 = vadd.f32 0.0, %v369
  %v371 = vpop.f32.mrf.mxu0
  %372 = vmatprep.mubr.f32.mxu0 0.0
  %v373 = vand.u32 %v98, 4294901760
  %v374 = vsub.f32 %v98, %v373
  %v375 = vand.u32 %v374, 4294901760
  %v376 = vsub.f32 %v374, %v375
  %v377 = vand.u32 %v376, 4294901760
  %378 = vmatmul.mubr.f32.gmra.mxu0 %v377
  %v379 = vpop.f32.mrf.mxu0
  %v380 = vadd.f32 0.0, %v379
  %v381 = vpop.f32.mrf.mxu0
  %382 = vmatprep.mubr.f32.mxu0 0.0
  %v383 = vand.u32 %v101, 4294901760
  %v384 = vsub.f32 %v101, %v383
  %v385 = vand.u32 %v384, 4294901760
  %v386 = vsub.f32 %v384, %v385
  %v387 = vand.u32 %v386, 4294901760
  %388 = vmatmul.mubr.f32.gmra.mxu0 %v387
  %v389 = vpop.f32.mrf.mxu0
  %v390 = vadd.f32 0.0, %v389
  %v391 = vpop.f32.mrf.mxu0
  %392 = vmatprep.mubr.f32.mxu0 0.0
  %v393 = vand.u32 %v104, 4294901760
  %v394 = vsub.f32 %v104, %v393
  %v395 = vand.u32 %v394, 4294901760
  %v396 = vsub.f32 %v394, %v395
  %v397 = vand.u32 %v396, 4294901760
  %398 = vmatmul.mubr.f32.gmra.mxu0 %v397
  %v399 = vpop.f32.mrf.mxu0
  %v400 = vadd.f32 0.0, %v399
  %v401 = vpop.f32.mrf.mxu0
  %402 = vmatprep.mubr.f32.mxu0 0.0
  %v403 = vand.u32 %v107, 4294901760
  %v404 = vsub.f32 %v107, %v403
  %v405 = vand.u32 %v404, 4294901760
  %v406 = vsub.f32 %v404, %v405
  %v407 = vand.u32 %v406, 4294901760
  %408 = vmatmul.mubr.f32.gmra.mxu0 %v407
  %v409 = vpop.f32.mrf.mxu0
  %v410 = vadd.f32 0.0, %v409
  %v411 = vpop.f32.mrf.mxu0
  %412 = vmatprep.mubr.f32.mxu0 0.0
  %v413 = vand.u32 %v110, 4294901760
  %v414 = vsub.f32 %v110, %v413
  %v415 = vand.u32 %v414, 4294901760
  %v416 = vsub.f32 %v414, %v415
  %v417 = vand.u32 %v416, 4294901760
  %418 = vmatmul.mubr.f32.gmra.mxu0 %v417
  %v419 = vpop.f32.mrf.mxu0
  %v420 = vadd.f32 0.0, %v419
  %v421 = vpop.f32.mrf.mxu0
  %422 = vmatprep.mubr.f32.mxu0 0.0
  %v423 = vand.u32 %v113, 4294901760
  %v424 = vsub.f32 %v113, %v423
  %v425 = vand.u32 %v424, 4294901760
  %v426 = vsub.f32 %v424, %v425
  %v427 = vand.u32 %v426, 4294901760
  %428 = vmatmul.mubr.f32.gmra.mxu0 %v427
  %v429 = vpop.f32.mrf.mxu0
  %v430 = vadd.f32 0.0, %v429
  %v431 = vpop.f32.mrf.mxu0
  %432 = vmatprep.mubr.f32.mxu0 0.0
  %v433 = vand.u32 %v116, 4294901760
  %v434 = vsub.f32 %v116, %v433
  %v435 = vand.u32 %v434, 4294901760
  %v436 = vsub.f32 %v434, %v435
  %v437 = vand.u32 %v436, 4294901760
  %438 = vmatmul.mubr.f32.gmra.mxu0 %v437
  %v439 = vpop.f32.mrf.mxu0
  %v440 = vadd.f32 0.0, %v439
  %v441 = vpop.f32.mrf.mxu0
  %442 = vdwg.mxu0
  %443 = vmatprep.subr.mxu0 0.0
  %444 = vmatpush1.msra.mxu0 0.0
  %445 = vmatprep.subr.mxu0 0.0
  %446 = vmatpush1.msra.mxu0 0.0
  %447 = vmatprep.subr.mxu0 0.0
  %448 = vmatpush1.msra.mxu0 0.0
  %449 = vmatprep.subr.mxu0 0.0
  %450 = vmatpush1.msra.mxu0 0.0
  %451 = vmatprep.subr.mxu0 0.0
  %452 = vmatpush1.msra.mxu0 0.0
  %453 = vmatprep.subr.mxu0 0.0
  %454 = vmatpush1.msra.mxu0 0.0
  %455 = vmatprep.subr.mxu0 0.0
  %456 = vmatpush1.msra.mxu0 0.0
  %457 = vmatprep.subr.mxu0 0.0
  %458 = vmatpush1.msra.mxu0 0.0
  %459 = vmatprep.subr.mxu0 0.0
  %460 = vmatpush1.msra.mxu0 0.0
  %461 = vmatprep.subr.mxu0 0.0
  %462 = vmatpush1.msra.mxu0 0.0
  %463 = vmatprep.subr.mxu0 0.0
  %v464 = vand.u32 %v120, 4294901760
  %v465 = vsub.f32 %v120, %v464
  %v466 = vand.u32 %v465, 4294901760
  %v467 = vsub.f32 %v465, %v466
  %v468 = vand.u32 %v467, 4294901760
  %469 = vmatpush1.msra.mxu0 %v468
  %470 = vmatprep.subr.mxu0 0.0
  %v471 = vand.u32 %v40, 4294901760
  %v472 = vsub.f32 %v40, %v471
  %v473 = vand.u32 %v472, 4294901760
  %v474 = vsub.f32 %v472, %v473
  %v475 = vand.u32 %v474, 4294901760
  %476 = vmatpush1.msra.mxu0 %v475
  %477 = vmatprep.subr.mxu0 0.0
  %v478 = vand.u32 %v39, 4294901760
  %v479 = vsub.f32 %v39, %v478
  %v480 = vand.u32 %v479, 4294901760
  %v481 = vsub.f32 %v479, %v480
  %v482 = vand.u32 %v481, 4294901760
  %483 = vmatpush1.msra.mxu0 %v482
  %484 = vmatprep.subr.mxu0 0.0
  %v485 = vand.u32 %v38, 4294901760
  %v486 = vsub.f32 %v38, %v485
  %v487 = vand.u32 %v486, 4294901760
  %v488 = vsub.f32 %v486, %v487
  %v489 = vand.u32 %v488, 4294901760
  %490 = vmatpush1.msra.mxu0 %v489
  %491 = vmatprep.subr.mxu0 0.0
  %v492 = vand.u32 %v37, 4294901760
  %v493 = vsub.f32 %v37, %v492
  %v494 = vand.u32 %v493, 4294901760
  %v495 = vsub.f32 %v493, %v494
  %v496 = vand.u32 %v495, 4294901760
  %497 = vmatpush1.msra.mxu0 %v496
  %498 = vmatprep.subr.mxu0 0.0
  %v499 = vand.u32 %v36, 4294901760
  %v500 = vsub.f32 %v36, %v499
  %v501 = vand.u32 %v500, 4294901760
  %v502 = vsub.f32 %v500, %v501
  %v503 = vand.u32 %v502, 4294901760
  %504 = vmatpush1.msra.mxu0 %v503
  %505 = vmatprep.subr.mxu0 0.0
  %506 = vmatpush2.msra.mxu0 0.0
  %507 = vmatprep.subr.mxu0 0.0
  %508 = vmatpush2.msra.mxu0 0.0
  %509 = vmatprep.subr.mxu0 0.0
  %510 = vmatpush2.msra.mxu0 0.0
  %511 = vmatprep.subr.mxu0 0.0
  %512 = vmatpush2.msra.mxu0 0.0
  %513 = vmatprep.subr.mxu0 0.0
  %514 = vmatpush2.msra.mxu0 0.0
  %515 = vmatprep.subr.mxu0 0.0
  %516 = vmatpush2.msra.mxu0 0.0
  %517 = vmatprep.subr.mxu0 0.0
  %518 = vmatpush2.msra.mxu0 0.0
  %519 = vmatprep.subr.mxu0 0.0
  %520 = vmatpush2.msra.mxu0 0.0
  %521 = vmatprep.subr.mxu0 0.0
  %522 = vmatpush2.msra.mxu0 0.0
  %523 = vmatprep.subr.mxu0 0.0
  %524 = vmatpush2.msra.mxu0 0.0
  %525 = vmatprep.subr.mxu0 0.0
  %526 = vmatpush2.msra.mxu0 0.0
  %527 = vmatprep.subr.mxu0 0.0
  %528 = vmatpush2.msra.mxu0 0.0
  %529 = vmatprep.subr.mxu0 0.0
  %530 = vmatpush2.msra.mxu0 0.0
  %531 = vmatprep.subr.mxu0 0.0
  %532 = vmatpush2.msra.mxu0 0.0
  %533 = vmatprep.subr.mxu0 0.0
  %534 = vmatpush2.msra.mxu0 0.0
  %535 = vmatprep.subr.mxu0 0.0
  %536 = vmatpush2.msra.mxu0 0.0
  %537 = vmatprep.mubr.f32.mxu0 0.0
  %v538 = vand.u32 %v44, 4294901760
  %539 = vmatmul.mubr.f32.gmra.mxu0 %v538
  %v540 = vpop.f32.mrf.mxu0
  %v541 = vadd.f32 %v200, %v540
  %v542 = vpop.f32.mrf.mxu0
  %543 = vmatprep.mubr.f32.mxu0 0.0
  %v544 = vand.u32 %v47, 4294901760
  %545 = vmatmul.mubr.f32.gmra.mxu0 %v544
  %v546 = vpop.f32.mrf.mxu0
  %v547 = vadd.f32 %v210, %v546
  %v548 = vpop.f32.mrf.mxu0
  %549 = vmatprep.mubr.f32.mxu0 0.0
  %v550 = vand.u32 %v50, 4294901760
  %551 = vmatmul.mubr.f32.gmra.mxu0 %v550
  %v552 = vpop.f32.mrf.mxu0
  %v553 = vadd.f32 %v220, %v552
  %v554 = vpop.f32.mrf.mxu0
  %555 = vmatprep.mubr.f32.mxu0 0.0
  %v556 = vand.u32 %v53, 4294901760
  %557 = vmatmul.mubr.f32.gmra.mxu0 %v556
  %v558 = vpop.f32.mrf.mxu0
  %v559 = vadd.f32 %v230, %v558
  %v560 = vpop.f32.mrf.mxu0
  %561 = vmatprep.mubr.f32.mxu0 0.0
  %v562 = vand.u32 %v56, 4294901760
  %563 = vmatmul.mubr.f32.gmra.mxu0 %v562
  %v564 = vpop.f32.mrf.mxu0
  %v565 = vadd.f32 %v240, %v564
  %v566 = vpop.f32.mrf.mxu0
  %567 = vmatprep.mubr.f32.mxu0 0.0
  %v568 = vand.u32 %v59, 4294901760
  %569 = vmatmul.mubr.f32.gmra.mxu0 %v568
  %v570 = vpop.f32.mrf.mxu0
  %v571 = vadd.f32 %v250, %v570
  %v572 = vpop.f32.mrf.mxu0
  %573 = vmatprep.mubr.f32.mxu0 0.0
  %v574 = vand.u32 %v62, 4294901760
  %575 = vmatmul.mubr.f32.gmra.mxu0 %v574
  %v576 = vpop.f32.mrf.mxu0
  %v577 = vadd.f32 %v260, %v576
  %v578 = vpop.f32.mrf.mxu0
  %579 = vmatprep.mubr.f32.mxu0 0.0
  %v580 = vand.u32 %v65, 4294901760
  %581 = vmatmul.mubr.f32.gmra.mxu0 %v580
  %v582 = vpop.f32.mrf.mxu0
  %v583 = vadd.f32 %v270, %v582
  %v584 = vpop.f32.mrf.mxu0
  %585 = vmatprep.mubr.f32.mxu0 0.0
  %v586 = vand.u32 %v68, 4294901760
  %587 = vmatmul.mubr.f32.gmra.mxu0 %v586
  %v588 = vpop.f32.mrf.mxu0
  %v589 = vadd.f32 %v280, %v588
  %v590 = vpop.f32.mrf.mxu0
  %591 = vmatprep.mubr.f32.mxu0 0.0
  %v592 = vand.u32 %v71, 4294901760
  %593 = vmatmul.mubr.f32.gmra.mxu0 %v592
  %v594 = vpop.f32.mrf.mxu0
  %v595 = vadd.f32 %v290, %v594
  %v596 = vpop.f32.mrf.mxu0
  %597 = vmatprep.mubr.f32.mxu0 0.0
  %v598 = vand.u32 %v74, 4294901760
  %599 = vmatmul.mubr.f32.gmra.mxu0 %v598
  %v600 = vpop.f32.mrf.mxu0
  %v601 = vadd.f32 %v300, %v600
  %v602 = vpop.f32.mrf.mxu0
  %603 = vmatprep.mubr.f32.mxu0 0.0
  %v604 = vand.u32 %v77, 4294901760
  %605 = vmatmul.mubr.f32.gmra.mxu0 %v604
  %v606 = vpop.f32.mrf.mxu0
  %v607 = vadd.f32 %v310, %v606
  %v608 = vpop.f32.mrf.mxu0
  %609 = vmatprep.mubr.f32.mxu0 0.0
  %v610 = vand.u32 %v80, 4294901760
  %611 = vmatmul.mubr.f32.gmra.mxu0 %v610
  %v612 = vpop.f32.mrf.mxu0
  %v613 = vadd.f32 %v320, %v612
  %v614 = vpop.f32.mrf.mxu0
  %615 = vmatprep.mubr.f32.mxu0 0.0
  %v616 = vand.u32 %v83, 4294901760
  %617 = vmatmul.mubr.f32.gmra.mxu0 %v616
  %v618 = vpop.f32.mrf.mxu0
  %v619 = vadd.f32 %v330, %v618
  %v620 = vpop.f32.mrf.mxu0
  %621 = vmatprep.mubr.f32.mxu0 0.0
  %v622 = vand.u32 %v86, 4294901760
  %623 = vmatmul.mubr.f32.gmra.mxu0 %v622
  %v624 = vpop.f32.mrf.mxu0
  %v625 = vadd.f32 %v340, %v624
  %v626 = vpop.f32.mrf.mxu0
  %627 = vmatprep.mubr.f32.mxu0 0.0
  %v628 = vand.u32 %v89, 4294901760
  %629 = vmatmul.mubr.f32.gmra.mxu0 %v628
  %v630 = vpop.f32.mrf.mxu0
  %v631 = vadd.f32 %v350, %v630
  %v632 = vpop.f32.mrf.mxu0
  %633 = vmatprep.mubr.f32.mxu0 0.0
  %v634 = vand.u32 %v92, 4294901760
  %635 = vmatmul.mubr.f32.gmra.mxu0 %v634
  %v636 = vpop.f32.mrf.mxu0
  %v637 = vadd.f32 %v360, %v636
  %v638 = vpop.f32.mrf.mxu0
  %639 = vmatprep.mubr.f32.mxu0 0.0
  %v640 = vand.u32 %v95, 4294901760
  %641 = vmatmul.mubr.f32.gmra.mxu0 %v640
  %v642 = vpop.f32.mrf.mxu0
  %v643 = vadd.f32 %v370, %v642
  %v644 = vpop.f32.mrf.mxu0
  %645 = vmatprep.mubr.f32.mxu0 0.0
  %v646 = vand.u32 %v98, 4294901760
  %647 = vmatmul.mubr.f32.gmra.mxu0 %v646
  %v648 = vpop.f32.mrf.mxu0
  %v649 = vadd.f32 %v380, %v648
  %v650 = vpop.f32.mrf.mxu0
  %651 = vmatprep.mubr.f32.mxu0 0.0
  %v652 = vand.u32 %v101, 4294901760
  %653 = vmatmul.mubr.f32.gmra.mxu0 %v652
  %v654 = vpop.f32.mrf.mxu0
  %v655 = vadd.f32 %v390, %v654
  %v656 = vpop.f32.mrf.mxu0
  %657 = vmatprep.mubr.f32.mxu0 0.0
  %v658 = vand.u32 %v104, 4294901760
  %659 = vmatmul.mubr.f32.gmra.mxu0 %v658
  %v660 = vpop.f32.mrf.mxu0
  %v661 = vadd.f32 %v400, %v660
  %v662 = vpop.f32.mrf.mxu0
  %663 = vmatprep.mubr.f32.mxu0 0.0
  %v664 = vand.u32 %v107, 4294901760
  %665 = vmatmul.mubr.f32.gmra.mxu0 %v664
  %v666 = vpop.f32.mrf.mxu0
  %v667 = vadd.f32 %v410, %v666
  %v668 = vpop.f32.mrf.mxu0
  %669 = vmatprep.mubr.f32.mxu0 0.0
  %v670 = vand.u32 %v110, 4294901760
  %671 = vmatmul.mubr.f32.gmra.mxu0 %v670
  %v672 = vpop.f32.mrf.mxu0
  %v673 = vadd.f32 %v420, %v672
  %v674 = vpop.f32.mrf.mxu0
  %675 = vmatprep.mubr.f32.mxu0 0.0
  %v676 = vand.u32 %v113, 4294901760
  %677 = vmatmul.mubr.f32.gmra.mxu0 %v676
  %v678 = vpop.f32.mrf.mxu0
  %v679 = vadd.f32 %v430, %v678
  %v680 = vpop.f32.mrf.mxu0
  %681 = vmatprep.mubr.f32.mxu0 0.0
  %v682 = vand.u32 %v116, 4294901760
  %683 = vmatmul.mubr.f32.gmra.mxu0 %v682
  %v684 = vpop.f32.mrf.mxu0
  %v685 = vadd.f32 %v440, %v684
  %v686 = vpop.f32.mrf.mxu0
  %687 = vdwg.mxu0
  %688 = vmatprep.subr.mxu0 0.0
  %689 = vmatpush1.msra.mxu0 0.0
  %690 = vmatprep.subr.mxu0 0.0
  %691 = vmatpush1.msra.mxu0 0.0
  %692 = vmatprep.subr.mxu0 0.0
  %693 = vmatpush1.msra.mxu0 0.0
  %694 = vmatprep.subr.mxu0 0.0
  %695 = vmatpush1.msra.mxu0 0.0
  %696 = vmatprep.subr.mxu0 0.0
  %697 = vmatpush1.msra.mxu0 0.0
  %698 = vmatprep.subr.mxu0 0.0
  %699 = vmatpush1.msra.mxu0 0.0
  %700 = vmatprep.subr.mxu0 0.0
  %701 = vmatpush1.msra.mxu0 0.0
  %702 = vmatprep.subr.mxu0 0.0
  %703 = vmatpush1.msra.mxu0 0.0
  %704 = vmatprep.subr.mxu0 0.0
  %705 = vmatpush1.msra.mxu0 0.0
  %706 = vmatprep.subr.mxu0 0.0
  %707 = vmatpush1.msra.mxu0 0.0
  %708 = vmatprep.subr.mxu0 0.0
  %v709 = vand.u32 %v120, 4294901760
  %v710 = vsub.f32 %v120, %v709
  %711 = vmatpush1.msra.mxu0 %v710
  %712 = vmatprep.subr.mxu0 0.0
  %v713 = vand.u32 %v40, 4294901760
  %v714 = vsub.f32 %v40, %v713
  %715 = vmatpush1.msra.mxu0 %v714
  %716 = vmatprep.subr.mxu0 0.0
  %v717 = vand.u32 %v39, 4294901760
  %v718 = vsub.f32 %v39, %v717
  %719 = vmatpush1.msra.mxu0 %v718
  %720 = vmatprep.subr.mxu0 0.0
  %v721 = vand.u32 %v38, 4294901760
  %v722 = vsub.f32 %v38, %v721
  %723 = vmatpush1.msra.mxu0 %v722
  %724 = vmatprep.subr.mxu0 0.0
  %v725 = vand.u32 %v37, 4294901760
  %v726 = vsub.f32 %v37, %v725
  %727 = vmatpush1.msra.mxu0 %v726
  %728 = vmatprep.subr.mxu0 0.0
  %v729 = vand.u32 %v36, 4294901760
  %v730 = vsub.f32 %v36, %v729
  %731 = vmatpush1.msra.mxu0 %v730
  %732 = vmatprep.subr.mxu0 0.0
  %733 = vmatpush2.msra.mxu0 0.0
  %734 = vmatprep.subr.mxu0 0.0
  %735 = vmatpush2.msra.mxu0 0.0
  %736 = vmatprep.subr.mxu0 0.0
  %737 = vmatpush2.msra.mxu0 0.0
  %738 = vmatprep.subr.mxu0 0.0
  %739 = vmatpush2.msra.mxu0 0.0
  %740 = vmatprep.subr.mxu0 0.0
  %741 = vmatpush2.msra.mxu0 0.0
  %742 = vmatprep.subr.mxu0 0.0
  %743 = vmatpush2.msra.mxu0 0.0
  %744 = vmatprep.subr.mxu0 0.0
  %745 = vmatpush2.msra.mxu0 0.0
  %746 = vmatprep.subr.mxu0 0.0
  %747 = vmatpush2.msra.mxu0 0.0
  %748 = vmatprep.subr.mxu0 0.0
  %749 = vmatpush2.msra.mxu0 0.0
  %750 = vmatprep.subr.mxu0 0.0
  %751 = vmatpush2.msra.mxu0 0.0
  %752 = vmatprep.subr.mxu0 0.0
  %753 = vmatpush2.msra.mxu0 0.0
  %754 = vmatprep.subr.mxu0 0.0
  %755 = vmatpush2.msra.mxu0 0.0
  %756 = vmatprep.subr.mxu0 0.0
  %757 = vmatpush2.msra.mxu0 0.0
  %758 = vmatprep.subr.mxu0 0.0
  %759 = vmatpush2.msra.mxu0 0.0
  %760 = vmatprep.subr.mxu0 0.0
  %761 = vmatpush2.msra.mxu0 0.0
  %762 = vmatprep.subr.mxu0 0.0
  %763 = vmatpush2.msra.mxu0 0.0
  %764 = vmatprep.mubr.f32.mxu0 0.0
  %v765 = vand.u32 %v44, 4294901760
  %v766 = vsub.f32 %v44, %v765
  %767 = vmatmul.mubr.f32.gmra.mxu0 %v766
  %v768 = vpop.f32.mrf.mxu0
  %v769 = vadd.f32 %v541, %v768
  %v770 = vpop.f32.mrf.mxu0
  %771 = vmatprep.mubr.f32.mxu0 0.0
  %v772 = vand.u32 %v47, 4294901760
  %v773 = vsub.f32 %v47, %v772
  %774 = vmatmul.mubr.f32.gmra.mxu0 %v773
  %v775 = vpop.f32.mrf.mxu0
  %v776 = vadd.f32 %v547, %v775
  %v777 = vpop.f32.mrf.mxu0
  %778 = vmatprep.mubr.f32.mxu0 0.0
  %v779 = vand.u32 %v50, 4294901760
  %v780 = vsub.f32 %v50, %v779
  %781 = vmatmul.mubr.f32.gmra.mxu0 %v780
  %v782 = vpop.f32.mrf.mxu0
  %v783 = vadd.f32 %v553, %v782
  %v784 = vpop.f32.mrf.mxu0
  %785 = vmatprep.mubr.f32.mxu0 0.0
  %v786 = vand.u32 %v53, 4294901760
  %v787 = vsub.f32 %v53, %v786
  %788 = vmatmul.mubr.f32.gmra.mxu0 %v787
  %v789 = vpop.f32.mrf.mxu0
  %v790 = vadd.f32 %v559, %v789
  %v791 = vpop.f32.mrf.mxu0
  %792 = vmatprep.mubr.f32.mxu0 0.0
  %v793 = vand.u32 %v56, 4294901760
  %v794 = vsub.f32 %v56, %v793
  %795 = vmatmul.mubr.f32.gmra.mxu0 %v794
  %v796 = vpop.f32.mrf.mxu0
  %v797 = vadd.f32 %v565, %v796
  %v798 = vpop.f32.mrf.mxu0
  %799 = vmatprep.mubr.f32.mxu0 0.0
  %v800 = vand.u32 %v59, 4294901760
  %v801 = vsub.f32 %v59, %v800
  %802 = vmatmul.mubr.f32.gmra.mxu0 %v801
  %v803 = vpop.f32.mrf.mxu0
  %v804 = vadd.f32 %v571, %v803
  %v805 = vpop.f32.mrf.mxu0
  %806 = vmatprep.mubr.f32.mxu0 0.0
  %v807 = vand.u32 %v62, 4294901760
  %v808 = vsub.f32 %v62, %v807
  %809 = vmatmul.mubr.f32.gmra.mxu0 %v808
  %v810 = vpop.f32.mrf.mxu0
  %v811 = vadd.f32 %v577, %v810
  %v812 = vpop.f32.mrf.mxu0
  %813 = vmatprep.mubr.f32.mxu0 0.0
  %v814 = vand.u32 %v65, 4294901760
  %v815 = vsub.f32 %v65, %v814
  %816 = vmatmul.mubr.f32.gmra.mxu0 %v815
  %v817 = vpop.f32.mrf.mxu0
  %v818 = vadd.f32 %v583, %v817
  %v819 = vpop.f32.mrf.mxu0
  %820 = vmatprep.mubr.f32.mxu0 0.0
  %v821 = vand.u32 %v68, 4294901760
  %v822 = vsub.f32 %v68, %v821
  %823 = vmatmul.mubr.f32.gmra.mxu0 %v822
  %v824 = vpop.f32.mrf.mxu0
  %v825 = vadd.f32 %v589, %v824
  %v826 = vpop.f32.mrf.mxu0
  %827 = vmatprep.mubr.f32.mxu0 0.0
  %v828 = vand.u32 %v71, 4294901760
  %v829 = vsub.f32 %v71, %v828
  %830 = vmatmul.mubr.f32.gmra.mxu0 %v829
  %v831 = vpop.f32.mrf.mxu0
  %v832 = vadd.f32 %v595, %v831
  %v833 = vpop.f32.mrf.mxu0
  %834 = vmatprep.mubr.f32.mxu0 0.0
  %v835 = vand.u32 %v74, 4294901760
  %v836 = vsub.f32 %v74, %v835
  %837 = vmatmul.mubr.f32.gmra.mxu0 %v836
  %v838 = vpop.f32.mrf.mxu0
  %v839 = vadd.f32 %v601, %v838
  %v840 = vpop.f32.mrf.mxu0
  %841 = vmatprep.mubr.f32.mxu0 0.0
  %v842 = vand.u32 %v77, 4294901760
  %v843 = vsub.f32 %v77, %v842
  %844 = vmatmul.mubr.f32.gmra.mxu0 %v843
  %v845 = vpop.f32.mrf.mxu0
  %v846 = vadd.f32 %v607, %v845
  %v847 = vpop.f32.mrf.mxu0
  %848 = vmatprep.mubr.f32.mxu0 0.0
  %v849 = vand.u32 %v80, 4294901760
  %v850 = vsub.f32 %v80, %v849
  %851 = vmatmul.mubr.f32.gmra.mxu0 %v850
  %v852 = vpop.f32.mrf.mxu0
  %v853 = vadd.f32 %v613, %v852
  %v854 = vpop.f32.mrf.mxu0
  %855 = vmatprep.mubr.f32.mxu0 0.0
  %v856 = vand.u32 %v83, 4294901760
  %v857 = vsub.f32 %v83, %v856
  %858 = vmatmul.mubr.f32.gmra.mxu0 %v857
  %v859 = vpop.f32.mrf.mxu0
  %v860 = vadd.f32 %v619, %v859
  %v861 = vpop.f32.mrf.mxu0
  %862 = vmatprep.mubr.f32.mxu0 0.0
  %v863 = vand.u32 %v86, 4294901760
  %v864 = vsub.f32 %v86, %v863
  %865 = vmatmul.mubr.f32.gmra.mxu0 %v864
  %v866 = vpop.f32.mrf.mxu0
  %v867 = vadd.f32 %v625, %v866
  %v868 = vpop.f32.mrf.mxu0
  %869 = vmatprep.mubr.f32.mxu0 0.0
  %v870 = vand.u32 %v89, 4294901760
  %v871 = vsub.f32 %v89, %v870
  %872 = vmatmul.mubr.f32.gmra.mxu0 %v871
  %v873 = vpop.f32.mrf.mxu0
  %v874 = vadd.f32 %v631, %v873
  %v875 = vpop.f32.mrf.mxu0
  %876 = vmatprep.mubr.f32.mxu0 0.0
  %v877 = vand.u32 %v92, 4294901760
  %v878 = vsub.f32 %v92, %v877
  %879 = vmatmul.mubr.f32.gmra.mxu0 %v878
  %v880 = vpop.f32.mrf.mxu0
  %v881 = vadd.f32 %v637, %v880
  %v882 = vpop.f32.mrf.mxu0
  %883 = vmatprep.mubr.f32.mxu0 0.0
  %v884 = vand.u32 %v95, 4294901760
  %v885 = vsub.f32 %v95, %v884
  %886 = vmatmul.mubr.f32.gmra.mxu0 %v885
  %v887 = vpop.f32.mrf.mxu0
  %v888 = vadd.f32 %v643, %v887
  %v889 = vpop.f32.mrf.mxu0
  %890 = vmatprep.mubr.f32.mxu0 0.0
  %v891 = vand.u32 %v98, 4294901760
  %v892 = vsub.f32 %v98, %v891
  %893 = vmatmul.mubr.f32.gmra.mxu0 %v892
  %v894 = vpop.f32.mrf.mxu0
  %v895 = vadd.f32 %v649, %v894
  %v896 = vpop.f32.mrf.mxu0
  %897 = vmatprep.mubr.f32.mxu0 0.0
  %v898 = vand.u32 %v101, 4294901760
  %v899 = vsub.f32 %v101, %v898
  %900 = vmatmul.mubr.f32.gmra.mxu0 %v899
  %v901 = vpop.f32.mrf.mxu0
  %v902 = vadd.f32 %v655, %v901
  %v903 = vpop.f32.mrf.mxu0
  %904 = vmatprep.mubr.f32.mxu0 0.0
  %v905 = vand.u32 %v104, 4294901760
  %v906 = vsub.f32 %v104, %v905
  %907 = vmatmul.mubr.f32.gmra.mxu0 %v906
  %v908 = vpop.f32.mrf.mxu0
  %v909 = vadd.f32 %v661, %v908
  %v910 = vpop.f32.mrf.mxu0
  %911 = vmatprep.mubr.f32.mxu0 0.0
  %v912 = vand.u32 %v107, 4294901760
  %v913 = vsub.f32 %v107, %v912
  %914 = vmatmul.mubr.f32.gmra.mxu0 %v913
  %v915 = vpop.f32.mrf.mxu0
  %v916 = vadd.f32 %v667, %v915
  %v917 = vpop.f32.mrf.mxu0
  %918 = vmatprep.mubr.f32.mxu0 0.0
  %v919 = vand.u32 %v110, 4294901760
  %v920 = vsub.f32 %v110, %v919
  %921 = vmatmul.mubr.f32.gmra.mxu0 %v920
  %v922 = vpop.f32.mrf.mxu0
  %v923 = vadd.f32 %v673, %v922
  %v924 = vpop.f32.mrf.mxu0
  %925 = vmatprep.mubr.f32.mxu0 0.0
  %v926 = vand.u32 %v113, 4294901760
  %v927 = vsub.f32 %v113, %v926
  %928 = vmatmul.mubr.f32.gmra.mxu0 %v927
  %v929 = vpop.f32.mrf.mxu0
  %v930 = vadd.f32 %v679, %v929
  %v931 = vpop.f32.mrf.mxu0
  %932 = vmatprep.mubr.f32.mxu0 0.0
  %v933 = vand.u32 %v116, 4294901760
  %v934 = vsub.f32 %v116, %v933
  %935 = vmatmul.mubr.f32.gmra.mxu0 %v934
  %v936 = vpop.f32.mrf.mxu0
  %v937 = vadd.f32 %v685, %v936
  %v938 = vpop.f32.mrf.mxu0
  %939 = vdwg.mxu0
  %940 = vmatprep.subr.mxu0 0.0
  %941 = vmatpush1.msra.mxu0 0.0
  %942 = vmatprep.subr.mxu0 0.0
  %943 = vmatpush1.msra.mxu0 0.0
  %944 = vmatprep.subr.mxu0 0.0
  %945 = vmatpush1.msra.mxu0 0.0
  %946 = vmatprep.subr.mxu0 0.0
  %947 = vmatpush1.msra.mxu0 0.0
  %948 = vmatprep.subr.mxu0 0.0
  %949 = vmatpush1.msra.mxu0 0.0
  %950 = vmatprep.subr.mxu0 0.0
  %951 = vmatpush1.msra.mxu0 0.0
  %952 = vmatprep.subr.mxu0 0.0
  %953 = vmatpush1.msra.mxu0 0.0
  %954 = vmatprep.subr.mxu0 0.0
  %955 = vmatpush1.msra.mxu0 0.0
  %956 = vmatprep.subr.mxu0 0.0
  %957 = vmatpush1.msra.mxu0 0.0
  %958 = vmatprep.subr.mxu0 0.0
  %959 = vmatpush1.msra.mxu0 0.0
  %960 = vmatprep.subr.mxu0 0.0
  %v961 = vand.u32 %v120, 4294901760
  %962 = vmatpush1.msra.mxu0 %v961
  %963 = vmatprep.subr.mxu0 0.0
  %v964 = vand.u32 %v40, 4294901760
  %965 = vmatpush1.msra.mxu0 %v964
  %966 = vmatprep.subr.mxu0 0.0
  %v967 = vand.u32 %v39, 4294901760
  %968 = vmatpush1.msra.mxu0 %v967
  %969 = vmatprep.subr.mxu0 0.0
  %v970 = vand.u32 %v38, 4294901760
  %971 = vmatpush1.msra.mxu0 %v970
  %972 = vmatprep.subr.mxu0 0.0
  %v973 = vand.u32 %v37, 4294901760
  %974 = vmatpush1.msra.mxu0 %v973
  %975 = vmatprep.subr.mxu0 0.0
  %v976 = vand.u32 %v36, 4294901760
  %977 = vmatpush1.msra.mxu0 %v976
  %978 = vmatprep.subr.mxu0 0.0
  %979 = vmatpush2.msra.mxu0 0.0
  %980 = vmatprep.subr.mxu0 0.0
  %981 = vmatpush2.msra.mxu0 0.0
  %982 = vmatprep.subr.mxu0 0.0
  %983 = vmatpush2.msra.mxu0 0.0
  %984 = vmatprep.subr.mxu0 0.0
  %985 = vmatpush2.msra.mxu0 0.0
  %986 = vmatprep.subr.mxu0 0.0
  %987 = vmatpush2.msra.mxu0 0.0
  %988 = vmatprep.subr.mxu0 0.0
  %989 = vmatpush2.msra.mxu0 0.0
  %990 = vmatprep.subr.mxu0 0.0
  %991 = vmatpush2.msra.mxu0 0.0
  %992 = vmatprep.subr.mxu0 0.0
  %993 = vmatpush2.msra.mxu0 0.0
  %994 = vmatprep.subr.mxu0 0.0
  %995 = vmatpush2.msra.mxu0 0.0
  %996 = vmatprep.subr.mxu0 0.0
  %997 = vmatpush2.msra.mxu0 0.0
  %998 = vmatprep.subr.mxu0 0.0
  %999 = vmatpush2.msra.mxu0 0.0
  %1000 = vmatprep.subr.mxu0 0.0
  %1001 = vmatpush2.msra.mxu0 0.0
  %1002 = vmatprep.subr.mxu0 0.0
  %1003 = vmatpush2.msra.mxu0 0.0
  %1004 = vmatprep.subr.mxu0 0.0
  %1005 = vmatpush2.msra.mxu0 0.0
  %1006 = vmatprep.subr.mxu0 0.0
  %1007 = vmatpush2.msra.mxu0 0.0
  %1008 = vmatprep.subr.mxu0 0.0
  %1009 = vmatpush2.msra.mxu0 0.0
  %1010 = vmatprep.mubr.f32.mxu0 0.0
  %v1011 = vand.u32 %v44, 4294901760
  %v1012 = vsub.f32 %v44, %v1011
  %v1013 = vand.u32 %v1012, 4294901760
  %1014 = vmatmul.mubr.f32.gmra.mxu0 %v1013
  %v1015 = vpop.f32.mrf.mxu0
  %v1016 = vadd.f32 %v769, %v1015
  %v1017 = vpop.f32.mrf.mxu0
  %1018 = vmatprep.mubr.f32.mxu0 0.0
  %v1019 = vand.u32 %v47, 4294901760
  %v1020 = vsub.f32 %v47, %v1019
  %v1021 = vand.u32 %v1020, 4294901760
  %1022 = vmatmul.mubr.f32.gmra.mxu0 %v1021
  %v1023 = vpop.f32.mrf.mxu0
  %v1024 = vadd.f32 %v776, %v1023
  %v1025 = vpop.f32.mrf.mxu0
  %1026 = vmatprep.mubr.f32.mxu0 0.0
  %v1027 = vand.u32 %v50, 4294901760
  %v1028 = vsub.f32 %v50, %v1027
  %v1029 = vand.u32 %v1028, 4294901760
  %1030 = vmatmul.mubr.f32.gmra.mxu0 %v1029
  %v1031 = vpop.f32.mrf.mxu0
  %v1032 = vadd.f32 %v783, %v1031
  %v1033 = vpop.f32.mrf.mxu0
  %1034 = vmatprep.mubr.f32.mxu0 0.0
  %v1035 = vand.u32 %v53, 4294901760
  %v1036 = vsub.f32 %v53, %v1035
  %v1037 = vand.u32 %v1036, 4294901760
  %1038 = vmatmul.mubr.f32.gmra.mxu0 %v1037
  %v1039 = vpop.f32.mrf.mxu0
  %v1040 = vadd.f32 %v790, %v1039
  %v1041 = vpop.f32.mrf.mxu0
  %1042 = vmatprep.mubr.f32.mxu0 0.0
  %v1043 = vand.u32 %v56, 4294901760
  %v1044 = vsub.f32 %v56, %v1043
  %v1045 = vand.u32 %v1044, 4294901760
  %1046 = vmatmul.mubr.f32.gmra.mxu0 %v1045
  %v1047 = vpop.f32.mrf.mxu0
  %v1048 = vadd.f32 %v797, %v1047
  %v1049 = vpop.f32.mrf.mxu0
  %1050 = vmatprep.mubr.f32.mxu0 0.0
  %v1051 = vand.u32 %v59, 4294901760
  %v1052 = vsub.f32 %v59, %v1051
  %v1053 = vand.u32 %v1052, 4294901760
  %1054 = vmatmul.mubr.f32.gmra.mxu0 %v1053
  %v1055 = vpop.f32.mrf.mxu0
  %v1056 = vadd.f32 %v804, %v1055
  %v1057 = vpop.f32.mrf.mxu0
  %1058 = vmatprep.mubr.f32.mxu0 0.0
  %v1059 = vand.u32 %v62, 4294901760
  %v1060 = vsub.f32 %v62, %v1059
  %v1061 = vand.u32 %v1060, 4294901760
  %1062 = vmatmul.mubr.f32.gmra.mxu0 %v1061
  %v1063 = vpop.f32.mrf.mxu0
  %v1064 = vadd.f32 %v811, %v1063
  %v1065 = vpop.f32.mrf.mxu0
  %1066 = vmatprep.mubr.f32.mxu0 0.0
  %v1067 = vand.u32 %v65, 4294901760
  %v1068 = vsub.f32 %v65, %v1067
  %v1069 = vand.u32 %v1068, 4294901760
  %1070 = vmatmul.mubr.f32.gmra.mxu0 %v1069
  %v1071 = vpop.f32.mrf.mxu0
  %v1072 = vadd.f32 %v818, %v1071
  %v1073 = vpop.f32.mrf.mxu0
  %1074 = vmatprep.mubr.f32.mxu0 0.0
  %v1075 = vand.u32 %v68, 4294901760
  %v1076 = vsub.f32 %v68, %v1075
  %v1077 = vand.u32 %v1076, 4294901760
  %1078 = vmatmul.mubr.f32.gmra.mxu0 %v1077
  %v1079 = vpop.f32.mrf.mxu0
  %v1080 = vadd.f32 %v825, %v1079
  %v1081 = vpop.f32.mrf.mxu0
  %1082 = vmatprep.mubr.f32.mxu0 0.0
  %v1083 = vand.u32 %v71, 4294901760
  %v1084 = vsub.f32 %v71, %v1083
  %v1085 = vand.u32 %v1084, 4294901760
  %1086 = vmatmul.mubr.f32.gmra.mxu0 %v1085
  %v1087 = vpop.f32.mrf.mxu0
  %v1088 = vadd.f32 %v832, %v1087
  %v1089 = vpop.f32.mrf.mxu0
  %1090 = vmatprep.mubr.f32.mxu0 0.0
  %v1091 = vand.u32 %v74, 4294901760
  %v1092 = vsub.f32 %v74, %v1091
  %v1093 = vand.u32 %v1092, 4294901760
  %1094 = vmatmul.mubr.f32.gmra.mxu0 %v1093
  %v1095 = vpop.f32.mrf.mxu0
  %v1096 = vadd.f32 %v839, %v1095
  %v1097 = vpop.f32.mrf.mxu0
  %1098 = vmatprep.mubr.f32.mxu0 0.0
  %v1099 = vand.u32 %v77, 4294901760
  %v1100 = vsub.f32 %v77, %v1099
  %v1101 = vand.u32 %v1100, 4294901760
  %1102 = vmatmul.mubr.f32.gmra.mxu0 %v1101
  %v1103 = vpop.f32.mrf.mxu0
  %v1104 = vadd.f32 %v846, %v1103
  %v1105 = vpop.f32.mrf.mxu0
  %1106 = vmatprep.mubr.f32.mxu0 0.0
  %v1107 = vand.u32 %v80, 4294901760
  %v1108 = vsub.f32 %v80, %v1107
  %v1109 = vand.u32 %v1108, 4294901760
  %1110 = vmatmul.mubr.f32.gmra.mxu0 %v1109
  %v1111 = vpop.f32.mrf.mxu0
  %v1112 = vadd.f32 %v853, %v1111
  %v1113 = vpop.f32.mrf.mxu0
  %1114 = vmatprep.mubr.f32.mxu0 0.0
  %v1115 = vand.u32 %v83, 4294901760
  %v1116 = vsub.f32 %v83, %v1115
  %v1117 = vand.u32 %v1116, 4294901760
  %1118 = vmatmul.mubr.f32.gmra.mxu0 %v1117
  %v1119 = vpop.f32.mrf.mxu0
  %v1120 = vadd.f32 %v860, %v1119
  %v1121 = vpop.f32.mrf.mxu0
  %1122 = vmatprep.mubr.f32.mxu0 0.0
  %v1123 = vand.u32 %v86, 4294901760
  %v1124 = vsub.f32 %v86, %v1123
  %v1125 = vand.u32 %v1124, 4294901760
  %1126 = vmatmul.mubr.f32.gmra.mxu0 %v1125
  %v1127 = vpop.f32.mrf.mxu0
  %v1128 = vadd.f32 %v867, %v1127
  %v1129 = vpop.f32.mrf.mxu0
  %1130 = vmatprep.mubr.f32.mxu0 0.0
  %v1131 = vand.u32 %v89, 4294901760
  %v1132 = vsub.f32 %v89, %v1131
  %v1133 = vand.u32 %v1132, 4294901760
  %1134 = vmatmul.mubr.f32.gmra.mxu0 %v1133
  %v1135 = vpop.f32.mrf.mxu0
  %v1136 = vadd.f32 %v874, %v1135
  %v1137 = vpop.f32.mrf.mxu0
  %1138 = vmatprep.mubr.f32.mxu0 0.0
  %v1139 = vand.u32 %v92, 4294901760
  %v1140 = vsub.f32 %v92, %v1139
  %v1141 = vand.u32 %v1140, 4294901760
  %1142 = vmatmul.mubr.f32.gmra.mxu0 %v1141
  %v1143 = vpop.f32.mrf.mxu0
  %v1144 = vadd.f32 %v881, %v1143
  %v1145 = vpop.f32.mrf.mxu0
  %1146 = vmatprep.mubr.f32.mxu0 0.0
  %v1147 = vand.u32 %v95, 4294901760
  %v1148 = vsub.f32 %v95, %v1147
  %v1149 = vand.u32 %v1148, 4294901760
  %1150 = vmatmul.mubr.f32.gmra.mxu0 %v1149
  %v1151 = vpop.f32.mrf.mxu0
  %v1152 = vadd.f32 %v888, %v1151
  %v1153 = vpop.f32.mrf.mxu0
  %1154 = vmatprep.mubr.f32.mxu0 0.0
  %v1155 = vand.u32 %v98, 4294901760
  %v1156 = vsub.f32 %v98, %v1155
  %v1157 = vand.u32 %v1156, 4294901760
  %1158 = vmatmul.mubr.f32.gmra.mxu0 %v1157
  %v1159 = vpop.f32.mrf.mxu0
  %v1160 = vadd.f32 %v895, %v1159
  %v1161 = vpop.f32.mrf.mxu0
  %1162 = vmatprep.mubr.f32.mxu0 0.0
  %v1163 = vand.u32 %v101, 4294901760
  %v1164 = vsub.f32 %v101, %v1163
  %v1165 = vand.u32 %v1164, 4294901760
  %1166 = vmatmul.mubr.f32.gmra.mxu0 %v1165
  %v1167 = vpop.f32.mrf.mxu0
  %v1168 = vadd.f32 %v902, %v1167
  %v1169 = vpop.f32.mrf.mxu0
  %1170 = vmatprep.mubr.f32.mxu0 0.0
  %v1171 = vand.u32 %v104, 4294901760
  %v1172 = vsub.f32 %v104, %v1171
  %v1173 = vand.u32 %v1172, 4294901760
  %1174 = vmatmul.mubr.f32.gmra.mxu0 %v1173
  %v1175 = vpop.f32.mrf.mxu0
  %v1176 = vadd.f32 %v909, %v1175
  %v1177 = vpop.f32.mrf.mxu0
  %1178 = vmatprep.mubr.f32.mxu0 0.0
  %v1179 = vand.u32 %v107, 4294901760
  %v1180 = vsub.f32 %v107, %v1179
  %v1181 = vand.u32 %v1180, 4294901760
  %1182 = vmatmul.mubr.f32.gmra.mxu0 %v1181
  %v1183 = vpop.f32.mrf.mxu0
  %v1184 = vadd.f32 %v916, %v1183
  %v1185 = vpop.f32.mrf.mxu0
  %1186 = vmatprep.mubr.f32.mxu0 0.0
  %v1187 = vand.u32 %v110, 4294901760
  %v1188 = vsub.f32 %v110, %v1187
  %v1189 = vand.u32 %v1188, 4294901760
  %1190 = vmatmul.mubr.f32.gmra.mxu0 %v1189
  %v1191 = vpop.f32.mrf.mxu0
  %v1192 = vadd.f32 %v923, %v1191
  %v1193 = vpop.f32.mrf.mxu0
  %1194 = vmatprep.mubr.f32.mxu0 0.0
  %v1195 = vand.u32 %v113, 4294901760
  %v1196 = vsub.f32 %v113, %v1195
  %v1197 = vand.u32 %v1196, 4294901760
  %1198 = vmatmul.mubr.f32.gmra.mxu0 %v1197
  %v1199 = vpop.f32.mrf.mxu0
  %v1200 = vadd.f32 %v930, %v1199
  %v1201 = vpop.f32.mrf.mxu0
  %1202 = vmatprep.mubr.f32.mxu0 0.0
  %v1203 = vand.u32 %v116, 4294901760
  %v1204 = vsub.f32 %v116, %v1203
  %v1205 = vand.u32 %v1204, 4294901760
  %1206 = vmatmul.mubr.f32.gmra.mxu0 %v1205
  %v1207 = vpop.f32.mrf.mxu0
  %v1208 = vadd.f32 %v937, %v1207
  %v1209 = vpop.f32.mrf.mxu0
  %1210 = vdwg.mxu0
  %1211 = vmatprep.subr.mxu0 0.0
  %1212 = vmatpush1.msra.mxu0 0.0
  %1213 = vmatprep.subr.mxu0 0.0
  %1214 = vmatpush1.msra.mxu0 0.0
  %1215 = vmatprep.subr.mxu0 0.0
  %1216 = vmatpush1.msra.mxu0 0.0
  %1217 = vmatprep.subr.mxu0 0.0
  %1218 = vmatpush1.msra.mxu0 0.0
  %1219 = vmatprep.subr.mxu0 0.0
  %1220 = vmatpush1.msra.mxu0 0.0
  %1221 = vmatprep.subr.mxu0 0.0
  %1222 = vmatpush1.msra.mxu0 0.0
  %1223 = vmatprep.subr.mxu0 0.0
  %1224 = vmatpush1.msra.mxu0 0.0
  %1225 = vmatprep.subr.mxu0 0.0
  %1226 = vmatpush1.msra.mxu0 0.0
  %1227 = vmatprep.subr.mxu0 0.0
  %1228 = vmatpush1.msra.mxu0 0.0
  %1229 = vmatprep.subr.mxu0 0.0
  %1230 = vmatpush1.msra.mxu0 0.0
  %1231 = vmatprep.subr.mxu0 0.0
  %v1232 = vand.u32 %v120, 4294901760
  %v1233 = vsub.f32 %v120, %v1232
  %v1234 = vand.u32 %v1233, 4294901760
  %1235 = vmatpush1.msra.mxu0 %v1234
  %1236 = vmatprep.subr.mxu0 0.0
  %v1237 = vand.u32 %v40, 4294901760
  %v1238 = vsub.f32 %v40, %v1237
  %v1239 = vand.u32 %v1238, 4294901760
  %1240 = vmatpush1.msra.mxu0 %v1239
  %1241 = vmatprep.subr.mxu0 0.0
  %v1242 = vand.u32 %v39, 4294901760
  %v1243 = vsub.f32 %v39, %v1242
  %v1244 = vand.u32 %v1243, 4294901760
  %1245 = vmatpush1.msra.mxu0 %v1244
  %1246 = vmatprep.subr.mxu0 0.0
  %v1247 = vand.u32 %v38, 4294901760
  %v1248 = vsub.f32 %v38, %v1247
  %v1249 = vand.u32 %v1248, 4294901760
  %1250 = vmatpush1.msra.mxu0 %v1249
  %1251 = vmatprep.subr.mxu0 0.0
  %v1252 = vand.u32 %v37, 4294901760
  %v1253 = vsub.f32 %v37, %v1252
  %v1254 = vand.u32 %v1253, 4294901760
  %1255 = vmatpush1.msra.mxu0 %v1254
  %1256 = vmatprep.subr.mxu0 0.0
  %v1257 = vand.u32 %v36, 4294901760
  %v1258 = vsub.f32 %v36, %v1257
  %v1259 = vand.u32 %v1258, 4294901760
  %1260 = vmatpush1.msra.mxu0 %v1259
  %1261 = vmatprep.subr.mxu0 0.0
  %1262 = vmatpush2.msra.mxu0 0.0
  %1263 = vmatprep.subr.mxu0 0.0
  %1264 = vmatpush2.msra.mxu0 0.0
  %1265 = vmatprep.subr.mxu0 0.0
  %1266 = vmatpush2.msra.mxu0 0.0
  %1267 = vmatprep.subr.mxu0 0.0
  %1268 = vmatpush2.msra.mxu0 0.0
  %1269 = vmatprep.subr.mxu0 0.0
  %1270 = vmatpush2.msra.mxu0 0.0
  %1271 = vmatprep.subr.mxu0 0.0
  %1272 = vmatpush2.msra.mxu0 0.0
  %1273 = vmatprep.subr.mxu0 0.0
  %1274 = vmatpush2.msra.mxu0 0.0
  %1275 = vmatprep.subr.mxu0 0.0
  %1276 = vmatpush2.msra.mxu0 0.0
  %1277 = vmatprep.subr.mxu0 0.0
  %1278 = vmatpush2.msra.mxu0 0.0
  %1279 = vmatprep.subr.mxu0 0.0
  %1280 = vmatpush2.msra.mxu0 0.0
  %1281 = vmatprep.subr.mxu0 0.0
  %1282 = vmatpush2.msra.mxu0 0.0
  %1283 = vmatprep.subr.mxu0 0.0
  %1284 = vmatpush2.msra.mxu0 0.0
  %1285 = vmatprep.subr.mxu0 0.0
  %1286 = vmatpush2.msra.mxu0 0.0
  %1287 = vmatprep.subr.mxu0 0.0
  %1288 = vmatpush2.msra.mxu0 0.0
  %1289 = vmatprep.subr.mxu0 0.0
  %1290 = vmatpush2.msra.mxu0 0.0
  %1291 = vmatprep.subr.mxu0 0.0
  %1292 = vmatpush2.msra.mxu0 0.0
  %1293 = vmatprep.mubr.f32.mxu0 0.0
  %v1294 = vand.u32 %v44, 4294901760
  %1295 = vmatmul.mubr.f32.gmra.mxu0 %v1294
  %v1296 = vpop.f32.mrf.mxu0
  %v1297 = vadd.f32 %v1016, %v1296
  %v1298 = vpop.f32.mrf.mxu0
  %1299 = vmatprep.mubr.f32.mxu0 0.0
  %v1300 = vand.u32 %v47, 4294901760
  %1301 = vmatmul.mubr.f32.gmra.mxu0 %v1300
  %v1302 = vpop.f32.mrf.mxu0
  %v1303 = vadd.f32 %v1024, %v1302
  %v1304 = vpop.f32.mrf.mxu0
  %1305 = vmatprep.mubr.f32.mxu0 0.0
  %v1306 = vand.u32 %v50, 4294901760
  %1307 = vmatmul.mubr.f32.gmra.mxu0 %v1306
  %v1308 = vpop.f32.mrf.mxu0
  %v1309 = vadd.f32 %v1032, %v1308
  %v1310 = vpop.f32.mrf.mxu0
  %1311 = vmatprep.mubr.f32.mxu0 0.0
  %v1312 = vand.u32 %v53, 4294901760
  %1313 = vmatmul.mubr.f32.gmra.mxu0 %v1312
  %v1314 = vpop.f32.mrf.mxu0
  %v1315 = vadd.f32 %v1040, %v1314
  %v1316 = vpop.f32.mrf.mxu0
  %1317 = vmatprep.mubr.f32.mxu0 0.0
  %v1318 = vand.u32 %v56, 4294901760
  %1319 = vmatmul.mubr.f32.gmra.mxu0 %v1318
  %v1320 = vpop.f32.mrf.mxu0
  %v1321 = vadd.f32 %v1048, %v1320
  %v1322 = vpop.f32.mrf.mxu0
  %1323 = vmatprep.mubr.f32.mxu0 0.0
  %v1324 = vand.u32 %v59, 4294901760
  %1325 = vmatmul.mubr.f32.gmra.mxu0 %v1324
  %v1326 = vpop.f32.mrf.mxu0
  %v1327 = vadd.f32 %v1056, %v1326
  %v1328 = vpop.f32.mrf.mxu0
  %1329 = vmatprep.mubr.f32.mxu0 0.0
  %v1330 = vand.u32 %v62, 4294901760
  %1331 = vmatmul.mubr.f32.gmra.mxu0 %v1330
  %v1332 = vpop.f32.mrf.mxu0
  %v1333 = vadd.f32 %v1064, %v1332
  %v1334 = vpop.f32.mrf.mxu0
  %1335 = vmatprep.mubr.f32.mxu0 0.0
  %v1336 = vand.u32 %v65, 4294901760
  %1337 = vmatmul.mubr.f32.gmra.mxu0 %v1336
  %v1338 = vpop.f32.mrf.mxu0
  %v1339 = vadd.f32 %v1072, %v1338
  %v1340 = vpop.f32.mrf.mxu0
  %1341 = vmatprep.mubr.f32.mxu0 0.0
  %v1342 = vand.u32 %v68, 4294901760
  %1343 = vmatmul.mubr.f32.gmra.mxu0 %v1342
  %v1344 = vpop.f32.mrf.mxu0
  %v1345 = vadd.f32 %v1080, %v1344
  %v1346 = vpop.f32.mrf.mxu0
  %1347 = vmatprep.mubr.f32.mxu0 0.0
  %v1348 = vand.u32 %v71, 4294901760
  %1349 = vmatmul.mubr.f32.gmra.mxu0 %v1348
  %v1350 = vpop.f32.mrf.mxu0
  %v1351 = vadd.f32 %v1088, %v1350
  %v1352 = vpop.f32.mrf.mxu0
  %1353 = vmatprep.mubr.f32.mxu0 0.0
  %v1354 = vand.u32 %v74, 4294901760
  %1355 = vmatmul.mubr.f32.gmra.mxu0 %v1354
  %v1356 = vpop.f32.mrf.mxu0
  %v1357 = vadd.f32 %v1096, %v1356
  %v1358 = vpop.f32.mrf.mxu0
  %1359 = vmatprep.mubr.f32.mxu0 0.0
  %v1360 = vand.u32 %v77, 4294901760
  %1361 = vmatmul.mubr.f32.gmra.mxu0 %v1360
  %v1362 = vpop.f32.mrf.mxu0
  %v1363 = vadd.f32 %v1104, %v1362
  %v1364 = vpop.f32.mrf.mxu0
  %1365 = vmatprep.mubr.f32.mxu0 0.0
  %v1366 = vand.u32 %v80, 4294901760
  %1367 = vmatmul.mubr.f32.gmra.mxu0 %v1366
  %v1368 = vpop.f32.mrf.mxu0
  %v1369 = vadd.f32 %v1112, %v1368
  %v1370 = vpop.f32.mrf.mxu0
  %1371 = vmatprep.mubr.f32.mxu0 0.0
  %v1372 = vand.u32 %v83, 4294901760
  %1373 = vmatmul.mubr.f32.gmra.mxu0 %v1372
  %v1374 = vpop.f32.mrf.mxu0
  %v1375 = vadd.f32 %v1120, %v1374
  %v1376 = vpop.f32.mrf.mxu0
  %1377 = vmatprep.mubr.f32.mxu0 0.0
  %v1378 = vand.u32 %v86, 4294901760
  %1379 = vmatmul.mubr.f32.gmra.mxu0 %v1378
  %v1380 = vpop.f32.mrf.mxu0
  %v1381 = vadd.f32 %v1128, %v1380
  %v1382 = vpop.f32.mrf.mxu0
  %1383 = vmatprep.mubr.f32.mxu0 0.0
  %v1384 = vand.u32 %v89, 4294901760
  %1385 = vmatmul.mubr.f32.gmra.mxu0 %v1384
  %v1386 = vpop.f32.mrf.mxu0
  %v1387 = vadd.f32 %v1136, %v1386
  %v1388 = vpop.f32.mrf.mxu0
  %1389 = vmatprep.mubr.f32.mxu0 0.0
  %v1390 = vand.u32 %v92, 4294901760
  %1391 = vmatmul.mubr.f32.gmra.mxu0 %v1390
  %v1392 = vpop.f32.mrf.mxu0
  %v1393 = vadd.f32 %v1144, %v1392
  %v1394 = vpop.f32.mrf.mxu0
  %1395 = vmatprep.mubr.f32.mxu0 0.0
  %v1396 = vand.u32 %v95, 4294901760
  %1397 = vmatmul.mubr.f32.gmra.mxu0 %v1396
  %v1398 = vpop.f32.mrf.mxu0
  %v1399 = vadd.f32 %v1152, %v1398
  %v1400 = vpop.f32.mrf.mxu0
  %1401 = vmatprep.mubr.f32.mxu0 0.0
  %v1402 = vand.u32 %v98, 4294901760
  %1403 = vmatmul.mubr.f32.gmra.mxu0 %v1402
  %v1404 = vpop.f32.mrf.mxu0
  %v1405 = vadd.f32 %v1160, %v1404
  %v1406 = vpop.f32.mrf.mxu0
  %1407 = vmatprep.mubr.f32.mxu0 0.0
  %v1408 = vand.u32 %v101, 4294901760
  %1409 = vmatmul.mubr.f32.gmra.mxu0 %v1408
  %v1410 = vpop.f32.mrf.mxu0
  %v1411 = vadd.f32 %v1168, %v1410
  %v1412 = vpop.f32.mrf.mxu0
  %1413 = vmatprep.mubr.f32.mxu0 0.0
  %v1414 = vand.u32 %v104, 4294901760
  %1415 = vmatmul.mubr.f32.gmra.mxu0 %v1414
  %v1416 = vpop.f32.mrf.mxu0
  %v1417 = vadd.f32 %v1176, %v1416
  %v1418 = vpop.f32.mrf.mxu0
  %1419 = vmatprep.mubr.f32.mxu0 0.0
  %v1420 = vand.u32 %v107, 4294901760
  %1421 = vmatmul.mubr.f32.gmra.mxu0 %v1420
  %v1422 = vpop.f32.mrf.mxu0
  %v1423 = vadd.f32 %v1184, %v1422
  %v1424 = vpop.f32.mrf.mxu0
  %1425 = vmatprep.mubr.f32.mxu0 0.0
  %v1426 = vand.u32 %v110, 4294901760
  %1427 = vmatmul.mubr.f32.gmra.mxu0 %v1426
  %v1428 = vpop.f32.mrf.mxu0
  %v1429 = vadd.f32 %v1192, %v1428
  %v1430 = vpop.f32.mrf.mxu0
  %1431 = vmatprep.mubr.f32.mxu0 0.0
  %v1432 = vand.u32 %v113, 4294901760
  %1433 = vmatmul.mubr.f32.gmra.mxu0 %v1432
  %v1434 = vpop.f32.mrf.mxu0
  %v1435 = vadd.f32 %v1200, %v1434
  %v1436 = vpop.f32.mrf.mxu0
  %1437 = vmatprep.mubr.f32.mxu0 0.0
  %v1438 = vand.u32 %v116, 4294901760
  %1439 = vmatmul.mubr.f32.gmra.mxu0 %v1438
  %v1440 = vpop.f32.mrf.mxu0
  %v1441 = vadd.f32 %v1208, %v1440
  %v1442 = vpop.f32.mrf.mxu0
  %1443 = vdwg.mxu0
  %1444 = vmatprep.subr.mxu0 0.0
  %1445 = vmatpush1.msra.mxu0 0.0
  %1446 = vmatprep.subr.mxu0 0.0
  %1447 = vmatpush1.msra.mxu0 0.0
  %1448 = vmatprep.subr.mxu0 0.0
  %1449 = vmatpush1.msra.mxu0 0.0
  %1450 = vmatprep.subr.mxu0 0.0
  %1451 = vmatpush1.msra.mxu0 0.0
  %1452 = vmatprep.subr.mxu0 0.0
  %1453 = vmatpush1.msra.mxu0 0.0
  %1454 = vmatprep.subr.mxu0 0.0
  %1455 = vmatpush1.msra.mxu0 0.0
  %1456 = vmatprep.subr.mxu0 0.0
  %1457 = vmatpush1.msra.mxu0 0.0
  %1458 = vmatprep.subr.mxu0 0.0
  %1459 = vmatpush1.msra.mxu0 0.0
  %1460 = vmatprep.subr.mxu0 0.0
  %1461 = vmatpush1.msra.mxu0 0.0
  %1462 = vmatprep.subr.mxu0 0.0
  %1463 = vmatpush1.msra.mxu0 0.0
  %1464 = vmatprep.subr.mxu0 0.0
  %v1465 = vand.u32 %v120, 4294901760
  %1466 = vmatpush1.msra.mxu0 %v1465
  %1467 = vmatprep.subr.mxu0 0.0
  %v1468 = vand.u32 %v40, 4294901760
  %1469 = vmatpush1.msra.mxu0 %v1468
  %1470 = vmatprep.subr.mxu0 0.0
  %v1471 = vand.u32 %v39, 4294901760
  %1472 = vmatpush1.msra.mxu0 %v1471
  %1473 = vmatprep.subr.mxu0 0.0
  %v1474 = vand.u32 %v38, 4294901760
  %1475 = vmatpush1.msra.mxu0 %v1474
  %1476 = vmatprep.subr.mxu0 0.0
  %v1477 = vand.u32 %v37, 4294901760
  %1478 = vmatpush1.msra.mxu0 %v1477
  %1479 = vmatprep.subr.mxu0 0.0
  %v1480 = vand.u32 %v36, 4294901760
  %1481 = vmatpush1.msra.mxu0 %v1480
  %1482 = vmatprep.subr.mxu0 0.0
  %1483 = vmatpush2.msra.mxu0 0.0
  %1484 = vmatprep.subr.mxu0 0.0
  %1485 = vmatpush2.msra.mxu0 0.0
  %1486 = vmatprep.subr.mxu0 0.0
  %1487 = vmatpush2.msra.mxu0 0.0
  %1488 = vmatprep.subr.mxu0 0.0
  %1489 = vmatpush2.msra.mxu0 0.0
  %1490 = vmatprep.subr.mxu0 0.0
  %1491 = vmatpush2.msra.mxu0 0.0
  %1492 = vmatprep.subr.mxu0 0.0
  %1493 = vmatpush2.msra.mxu0 0.0
  %1494 = vmatprep.subr.mxu0 0.0
  %1495 = vmatpush2.msra.mxu0 0.0
  %1496 = vmatprep.subr.mxu0 0.0
  %1497 = vmatpush2.msra.mxu0 0.0
  %1498 = vmatprep.subr.mxu0 0.0
  %1499 = vmatpush2.msra.mxu0 0.0
  %1500 = vmatprep.subr.mxu0 0.0
  %1501 = vmatpush2.msra.mxu0 0.0
  %1502 = vmatprep.subr.mxu0 0.0
  %1503 = vmatpush2.msra.mxu0 0.0
  %1504 = vmatprep.subr.mxu0 0.0
  %1505 = vmatpush2.msra.mxu0 0.0
  %1506 = vmatprep.subr.mxu0 0.0
  %1507 = vmatpush2.msra.mxu0 0.0
  %1508 = vmatprep.subr.mxu0 0.0
  %1509 = vmatpush2.msra.mxu0 0.0
  %1510 = vmatprep.subr.mxu0 0.0
  %1511 = vmatpush2.msra.mxu0 0.0
  %1512 = vmatprep.subr.mxu0 0.0
  %1513 = vmatpush2.msra.mxu0 0.0
  %1514 = vmatprep.mubr.f32.mxu0 0.0
  %v1515 = vand.u32 %v44, 4294901760
  %1516 = vmatmul.mubr.f32.gmra.mxu0 %v1515
  %v1517 = vpop.f32.mrf.mxu0
  %v1518 = vadd.f32 %v1297, %v1517
  %v1519 = vpop.f32.mrf.mxu0
  %1520 = vmatprep.mubr.f32.mxu0 0.0
  %v1521 = vand.u32 %v47, 4294901760
  %1522 = vmatmul.mubr.f32.gmra.mxu0 %v1521
  %v1523 = vpop.f32.mrf.mxu0
  %v1524 = vadd.f32 %v1303, %v1523
  %v1525 = vpop.f32.mrf.mxu0
  %1526 = vmatprep.mubr.f32.mxu0 0.0
  %v1527 = vand.u32 %v50, 4294901760
  %1528 = vmatmul.mubr.f32.gmra.mxu0 %v1527
  %v1529 = vpop.f32.mrf.mxu0
  %v1530 = vadd.f32 %v1309, %v1529
  %v1531 = vpop.f32.mrf.mxu0
  %1532 = vmatprep.mubr.f32.mxu0 0.0
  %v1533 = vand.u32 %v53, 4294901760
  %1534 = vmatmul.mubr.f32.gmra.mxu0 %v1533
  %v1535 = vpop.f32.mrf.mxu0
  %v1536 = vadd.f32 %v1315, %v1535
  %v1537 = vpop.f32.mrf.mxu0
  %1538 = vmatprep.mubr.f32.mxu0 0.0
  %v1539 = vand.u32 %v56, 4294901760
  %1540 = vmatmul.mubr.f32.gmra.mxu0 %v1539
  %v1541 = vpop.f32.mrf.mxu0
  %v1542 = vadd.f32 %v1321, %v1541
  %v1543 = vpop.f32.mrf.mxu0
  %1544 = vmatprep.mubr.f32.mxu0 0.0
  %v1545 = vand.u32 %v59, 4294901760
  %1546 = vmatmul.mubr.f32.gmra.mxu0 %v1545
  %v1547 = vpop.f32.mrf.mxu0
  %v1548 = vadd.f32 %v1327, %v1547
  %v1549 = vpop.f32.mrf.mxu0
  %1550 = vmatprep.mubr.f32.mxu0 0.0
  %v1551 = vand.u32 %v62, 4294901760
  %1552 = vmatmul.mubr.f32.gmra.mxu0 %v1551
  %v1553 = vpop.f32.mrf.mxu0
  %v1554 = vadd.f32 %v1333, %v1553
  %v1555 = vpop.f32.mrf.mxu0
  %1556 = vmatprep.mubr.f32.mxu0 0.0
  %v1557 = vand.u32 %v65, 4294901760
  %1558 = vmatmul.mubr.f32.gmra.mxu0 %v1557
  %v1559 = vpop.f32.mrf.mxu0
  %v1560 = vadd.f32 %v1339, %v1559
  %v1561 = vpop.f32.mrf.mxu0
  %1562 = vmatprep.mubr.f32.mxu0 0.0
  %v1563 = vand.u32 %v68, 4294901760
  %1564 = vmatmul.mubr.f32.gmra.mxu0 %v1563
  %v1565 = vpop.f32.mrf.mxu0
  %v1566 = vadd.f32 %v1345, %v1565
  %v1567 = vpop.f32.mrf.mxu0
  %1568 = vmatprep.mubr.f32.mxu0 0.0
  %v1569 = vand.u32 %v71, 4294901760
  %1570 = vmatmul.mubr.f32.gmra.mxu0 %v1569
  %v1571 = vpop.f32.mrf.mxu0
  %v1572 = vadd.f32 %v1351, %v1571
  %v1573 = vpop.f32.mrf.mxu0
  %1574 = vmatprep.mubr.f32.mxu0 0.0
  %v1575 = vand.u32 %v74, 4294901760
  %1576 = vmatmul.mubr.f32.gmra.mxu0 %v1575
  %v1577 = vpop.f32.mrf.mxu0
  %v1578 = vadd.f32 %v1357, %v1577
  %v1579 = vpop.f32.mrf.mxu0
  %1580 = vmatprep.mubr.f32.mxu0 0.0
  %v1581 = vand.u32 %v77, 4294901760
  %1582 = vmatmul.mubr.f32.gmra.mxu0 %v1581
  %v1583 = vpop.f32.mrf.mxu0
  %v1584 = vadd.f32 %v1363, %v1583
  %v1585 = vpop.f32.mrf.mxu0
  %1586 = vmatprep.mubr.f32.mxu0 0.0
  %v1587 = vand.u32 %v80, 4294901760
  %1588 = vmatmul.mubr.f32.gmra.mxu0 %v1587
  %v1589 = vpop.f32.mrf.mxu0
  %v1590 = vadd.f32 %v1369, %v1589
  %v1591 = vpop.f32.mrf.mxu0
  %1592 = vmatprep.mubr.f32.mxu0 0.0
  %v1593 = vand.u32 %v83, 4294901760
  %1594 = vmatmul.mubr.f32.gmra.mxu0 %v1593
  %v1595 = vpop.f32.mrf.mxu0
  %v1596 = vadd.f32 %v1375, %v1595
  %v1597 = vpop.f32.mrf.mxu0
  %1598 = vmatprep.mubr.f32.mxu0 0.0
  %v1599 = vand.u32 %v86, 4294901760
  %1600 = vmatmul.mubr.f32.gmra.mxu0 %v1599
  %v1601 = vpop.f32.mrf.mxu0
  %v1602 = vadd.f32 %v1381, %v1601
  %v1603 = vpop.f32.mrf.mxu0
  %1604 = vmatprep.mubr.f32.mxu0 0.0
  %v1605 = vand.u32 %v89, 4294901760
  %1606 = vmatmul.mubr.f32.gmra.mxu0 %v1605
  %v1607 = vpop.f32.mrf.mxu0
  %v1608 = vadd.f32 %v1387, %v1607
  %v1609 = vpop.f32.mrf.mxu0
  %1610 = vmatprep.mubr.f32.mxu0 0.0
  %v1611 = vand.u32 %v92, 4294901760
  %1612 = vmatmul.mubr.f32.gmra.mxu0 %v1611
  %v1613 = vpop.f32.mrf.mxu0
  %v1614 = vadd.f32 %v1393, %v1613
  %v1615 = vpop.f32.mrf.mxu0
  %1616 = vmatprep.mubr.f32.mxu0 0.0
  %v1617 = vand.u32 %v95, 4294901760
  %1618 = vmatmul.mubr.f32.gmra.mxu0 %v1617
  %v1619 = vpop.f32.mrf.mxu0
  %v1620 = vadd.f32 %v1399, %v1619
  %v1621 = vpop.f32.mrf.mxu0
  %1622 = vmatprep.mubr.f32.mxu0 0.0
  %v1623 = vand.u32 %v98, 4294901760
  %1624 = vmatmul.mubr.f32.gmra.mxu0 %v1623
  %v1625 = vpop.f32.mrf.mxu0
  %v1626 = vadd.f32 %v1405, %v1625
  %v1627 = vpop.f32.mrf.mxu0
  %1628 = vmatprep.mubr.f32.mxu0 0.0
  %v1629 = vand.u32 %v101, 4294901760
  %1630 = vmatmul.mubr.f32.gmra.mxu0 %v1629
  %v1631 = vpop.f32.mrf.mxu0
  %v1632 = vadd.f32 %v1411, %v1631
  %v1633 = vpop.f32.mrf.mxu0
  %1634 = vmatprep.mubr.f32.mxu0 0.0
  %v1635 = vand.u32 %v104, 4294901760
  %1636 = vmatmul.mubr.f32.gmra.mxu0 %v1635
  %v1637 = vpop.f32.mrf.mxu0
  %v1638 = vadd.f32 %v1417, %v1637
  %v1639 = vpop.f32.mrf.mxu0
  %1640 = vmatprep.mubr.f32.mxu0 0.0
  %v1641 = vand.u32 %v107, 4294901760
  %1642 = vmatmul.mubr.f32.gmra.mxu0 %v1641
  %v1643 = vpop.f32.mrf.mxu0
  %v1644 = vadd.f32 %v1423, %v1643
  %v1645 = vpop.f32.mrf.mxu0
  %1646 = vmatprep.mubr.f32.mxu0 0.0
  %v1647 = vand.u32 %v110, 4294901760
  %1648 = vmatmul.mubr.f32.gmra.mxu0 %v1647
  %v1649 = vpop.f32.mrf.mxu0
  %v1650 = vadd.f32 %v1429, %v1649
  %v1651 = vpop.f32.mrf.mxu0
  %1652 = vmatprep.mubr.f32.mxu0 0.0
  %v1653 = vand.u32 %v113, 4294901760
  %1654 = vmatmul.mubr.f32.gmra.mxu0 %v1653
  %v1655 = vpop.f32.mrf.mxu0
  %v1656 = vadd.f32 %v1435, %v1655
  %v1657 = vpop.f32.mrf.mxu0
  %1658 = vmatprep.mubr.f32.mxu0 0.0
  %v1659 = vand.u32 %v116, 4294901760
  %1660 = vmatmul.mubr.f32.gmra.mxu0 %v1659
  %v1661 = vpop.f32.mrf.mxu0
  %v1662 = vadd.f32 %v1441, %v1661
  %v1663 = vpop.f32.mrf.mxu0
  %1664 = vdwg.mxu0
  %vm1665 = vcmask 39936
  %v1666 = vsel %vm1665, %v1518, -inf
  %1667 = vmax.xlane.f32.xlu0 %v1666
  %v1668 = vpop.xlane.xlu0 %1667
  %v1669 = vsel %vm1665, %v1524, -inf
  %1670 = vmax.xlane.f32.xlu0 %v1669
  %v1671 = vpop.xlane.xlu0 %1670
  %v1672 = vsel %vm1665, %v1530, -inf
  %1673 = vmax.xlane.f32.xlu0 %v1672
  %v1674 = vpop.xlane.xlu0 %1673
  %v1675 = vsel %vm1665, %v1536, -inf
  %1676 = vmax.xlane.f32.xlu0 %v1675
  %v1677 = vpop.xlane.xlu0 %1676
  %v1678 = vsel %vm1665, %v1542, -inf
  %1679 = vmax.xlane.f32.xlu0 %v1678
  %v1680 = vpop.xlane.xlu0 %1679
  %v1681 = vsel %vm1665, %v1548, -inf
  %1682 = vmax.xlane.f32.xlu0 %v1681
  %v1683 = vpop.xlane.xlu0 %1682
  %v1684 = vsel %vm1665, %v1554, -inf
  %1685 = vmax.xlane.f32.xlu0 %v1684
  %v1686 = vpop.xlane.xlu0 %1685
  %v1687 = vsel %vm1665, %v1560, -inf
  %1688 = vmax.xlane.f32.xlu0 %v1687
  %v1689 = vpop.xlane.xlu0 %1688
  %v1690 = vsel %vm1665, %v1566, -inf
  %1691 = vmax.xlane.f32.xlu0 %v1690
  %v1692 = vpop.xlane.xlu0 %1691
  %v1693 = vsel %vm1665, %v1572, -inf
  %1694 = vmax.xlane.f32.xlu0 %v1693
  %v1695 = vpop.xlane.xlu0 %1694
  %v1696 = vsel %vm1665, %v1578, -inf
  %1697 = vmax.xlane.f32.xlu0 %v1696
  %v1698 = vpop.xlane.xlu0 %1697
  %v1699 = vsel %vm1665, %v1584, -inf
  %1700 = vmax.xlane.f32.xlu0 %v1699
  %v1701 = vpop.xlane.xlu0 %1700
  %v1702 = vsel %vm1665, %v1590, -inf
  %1703 = vmax.xlane.f32.xlu0 %v1702
  %v1704 = vpop.xlane.xlu0 %1703
  %v1705 = vsel %vm1665, %v1596, -inf
  %1706 = vmax.xlane.f32.xlu0 %v1705
  %v1707 = vpop.xlane.xlu0 %1706
  %v1708 = vsel %vm1665, %v1602, -inf
  %1709 = vmax.xlane.f32.xlu0 %v1708
  %v1710 = vpop.xlane.xlu0 %1709
  %v1711 = vsel %vm1665, %v1608, -inf
  %1712 = vmax.xlane.f32.xlu0 %v1711
  %v1713 = vpop.xlane.xlu0 %1712
  %v1714 = vsel %vm1665, %v1614, -inf
  %1715 = vmax.xlane.f32.xlu0 %v1714
  %v1716 = vpop.xlane.xlu0 %1715
  %v1717 = vsel %vm1665, %v1620, -inf
  %1718 = vmax.xlane.f32.xlu0 %v1717
  %v1719 = vpop.xlane.xlu0 %1718
  %v1720 = vsel %vm1665, %v1626, -inf
  %1721 = vmax.xlane.f32.xlu0 %v1720
  %v1722 = vpop.xlane.xlu0 %1721
  %v1723 = vsel %vm1665, %v1632, -inf
  %1724 = vmax.xlane.f32.xlu0 %v1723
  %v1725 = vpop.xlane.xlu0 %1724
  %v1726 = vsel %vm1665, %v1638, -inf
  %1727 = vmax.xlane.f32.xlu0 %v1726
  %v1728 = vpop.xlane.xlu0 %1727
  %v1729 = vsel %vm1665, %v1644, -inf
  %1730 = vmax.xlane.f32.xlu0 %v1729
  %v1731 = vpop.xlane.xlu0 %1730
  %v1732 = vsel %vm1665, %v1650, -inf
  %1733 = vmax.xlane.f32.xlu0 %v1732
  %v1734 = vpop.xlane.xlu0 %1733
  %v1735 = vsel %vm1665, %v1656, -inf
  %1736 = vmax.xlane.f32.xlu0 %v1735
  %v1737 = vpop.xlane.xlu0 %1736
  %v1738 = vsel %vm1665, %v1662, -inf
  %1739 = vmax.xlane.f32.xlu0 %v1738
  %v1740 = vpop.xlane.xlu0 %1739
  %v1741 = vsub.f32 %v1518, %v1668
  %v1742 = vsub.f32 %v1524, %v1671
  %v1743 = vsub.f32 %v1530, %v1674
  %v1744 = vsub.f32 %v1536, %v1677
  %v1745 = vsub.f32 %v1542, %v1680
  %v1746 = vsub.f32 %v1548, %v1683
  %v1747 = vsub.f32 %v1554, %v1686
  %v1748 = vsub.f32 %v1560, %v1689
  %v1749 = vsub.f32 %v1566, %v1692
  %v1750 = vsub.f32 %v1572, %v1695
  %v1751 = vsub.f32 %v1578, %v1698
  %v1752 = vsub.f32 %v1584, %v1701
  %v1753 = vsub.f32 %v1590, %v1704
  %v1754 = vsub.f32 %v1596, %v1707
  %v1755 = vsub.f32 %v1602, %v1710
  %v1756 = vsub.f32 %v1608, %v1713
  %v1757 = vsub.f32 %v1614, %v1716
  %v1758 = vsub.f32 %v1620, %v1719
  %v1759 = vsub.f32 %v1626, %v1722
  %v1760 = vsub.f32 %v1632, %v1725
  %v1761 = vsub.f32 %v1638, %v1728
  %v1762 = vsub.f32 %v1644, %v1731
  %v1763 = vsub.f32 %v1650, %v1734
  %v1764 = vsub.f32 %v1656, %v1737
  %v1765 = vsub.f32 %v1662, %v1740
  %v1766 = vmul.f32 %v1741, 1.442695
  %v1767 = vpow.pop %v1766
  %v1768 = vmul.f32 %v1742, 1.442695
  %v1769 = vpow.pop %v1768
  %v1770 = vmul.f32 %v1743, 1.442695
  %v1771 = vpow.pop %v1770
  %v1772 = vmul.f32 %v1744, 1.442695
  %v1773 = vpow.pop %v1772
  %v1774 = vmul.f32 %v1745, 1.442695
  %v1775 = vpow.pop %v1774
  %v1776 = vmul.f32 %v1746, 1.442695
  %v1777 = vpow.pop %v1776
  %v1778 = vmul.f32 %v1747, 1.442695
  %v1779 = vpow.pop %v1778
  %v1780 = vmul.f32 %v1748, 1.442695
  %v1781 = vpow.pop %v1780
  %v1782 = vmul.f32 %v1749, 1.442695
  %v1783 = vpow.pop %v1782
  %v1784 = vmul.f32 %v1750, 1.442695
  %v1785 = vpow.pop %v1784
  %v1786 = vmul.f32 %v1751, 1.442695
  %v1787 = vpow.pop %v1786
  %v1788 = vmul.f32 %v1752, 1.442695
  %v1789 = vpow.pop %v1788
  %v1790 = vmul.f32 %v1753, 1.442695
  %v1791 = vpow.pop %v1790
  %v1792 = vmul.f32 %v1754, 1.442695
  %v1793 = vpow.pop %v1792
  %v1794 = vmul.f32 %v1755, 1.442695
  %v1795 = vpow.pop %v1794
  %v1796 = vmul.f32 %v1756, 1.442695
  %v1797 = vpow.pop %v1796
  %v1798 = vmul.f32 %v1757, 1.442695
  %v1799 = vpow.pop %v1798
  %v1800 = vmul.f32 %v1758, 1.442695
  %v1801 = vpow.pop %v1800
  %v1802 = vmul.f32 %v1759, 1.442695
  %v1803 = vpow.pop %v1802
  %v1804 = vmul.f32 %v1760, 1.442695
  %v1805 = vpow.pop %v1804
  %v1806 = vmul.f32 %v1761, 1.442695
  %v1807 = vpow.pop %v1806
  %v1808 = vmul.f32 %v1762, 1.442695
  %v1809 = vpow.pop %v1808
  %v1810 = vmul.f32 %v1763, 1.442695
  %v1811 = vpow.pop %v1810
  %v1812 = vmul.f32 %v1764, 1.442695
  %v1813 = vpow.pop %v1812
  %v1814 = vmul.f32 %v1765, 1.442695
  %v1815 = vpow.pop %v1814
  %v1816 = vsel %vm1665, %v1767, 0.0
  %1817 = vadd.xlane.f32.xlu0 %v1816
  %v1818 = vpop.xlane.xlu0 %1817
  %v1819 = vsel %vm1665, %v1769, 0.0
  %1820 = vadd.xlane.f32.xlu0 %v1819
  %v1821 = vpop.xlane.xlu0 %1820
  %v1822 = vsel %vm1665, %v1771, 0.0
  %1823 = vadd.xlane.f32.xlu0 %v1822
  %v1824 = vpop.xlane.xlu0 %1823
  %v1825 = vsel %vm1665, %v1773, 0.0
  %1826 = vadd.xlane.f32.xlu0 %v1825
  %v1827 = vpop.xlane.xlu0 %1826
  %v1828 = vsel %vm1665, %v1775, 0.0
  %1829 = vadd.xlane.f32.xlu0 %v1828
  %v1830 = vpop.xlane.xlu0 %1829
  %v1831 = vsel %vm1665, %v1777, 0.0
  %1832 = vadd.xlane.f32.xlu0 %v1831
  %v1833 = vpop.xlane.xlu0 %1832
  %v1834 = vsel %vm1665, %v1779, 0.0
  %1835 = vadd.xlane.f32.xlu0 %v1834
  %v1836 = vpop.xlane.xlu0 %1835
  %v1837 = vsel %vm1665, %v1781, 0.0
  %1838 = vadd.xlane.f32.xlu0 %v1837
  %v1839 = vpop.xlane.xlu0 %1838
  %v1840 = vsel %vm1665, %v1783, 0.0
  %1841 = vadd.xlane.f32.xlu0 %v1840
  %v1842 = vpop.xlane.xlu0 %1841
  %v1843 = vsel %vm1665, %v1785, 0.0
  %1844 = vadd.xlane.f32.xlu0 %v1843
  %v1845 = vpop.xlane.xlu0 %1844
  %v1846 = vsel %vm1665, %v1787, 0.0
  %1847 = vadd.xlane.f32.xlu0 %v1846
  %v1848 = vpop.xlane.xlu0 %1847
  %v1849 = vsel %vm1665, %v1789, 0.0
  %1850 = vadd.xlane.f32.xlu0 %v1849
  %v1851 = vpop.xlane.xlu0 %1850
  %v1852 = vsel %vm1665, %v1791, 0.0
  %1853 = vadd.xlane.f32.xlu0 %v1852
  %v1854 = vpop.xlane.xlu0 %1853
  %v1855 = vsel %vm1665, %v1793, 0.0
  %1856 = vadd.xlane.f32.xlu0 %v1855
  %v1857 = vpop.xlane.xlu0 %1856
  %v1858 = vsel %vm1665, %v1795, 0.0
  %1859 = vadd.xlane.f32.xlu0 %v1858
  %v1860 = vpop.xlane.xlu0 %1859
  %v1861 = vsel %vm1665, %v1797, 0.0
  %1862 = vadd.xlane.f32.xlu0 %v1861
  %v1863 = vpop.xlane.xlu0 %1862
  %v1864 = vsel %vm1665, %v1799, 0.0
  %1865 = vadd.xlane.f32.xlu0 %v1864
  %v1866 = vpop.xlane.xlu0 %1865
  %v1867 = vsel %vm1665, %v1801, 0.0
  %1868 = vadd.xlane.f32.xlu0 %v1867
  %v1869 = vpop.xlane.xlu0 %1868
  %v1870 = vsel %vm1665, %v1803, 0.0
  %1871 = vadd.xlane.f32.xlu0 %v1870
  %v1872 = vpop.xlane.xlu0 %1871
  %v1873 = vsel %vm1665, %v1805, 0.0
  %1874 = vadd.xlane.f32.xlu0 %v1873
  %v1875 = vpop.xlane.xlu0 %1874
  %v1876 = vsel %vm1665, %v1807, 0.0
  %1877 = vadd.xlane.f32.xlu0 %v1876
  %v1878 = vpop.xlane.xlu0 %1877
  %v1879 = vsel %vm1665, %v1809, 0.0
  %1880 = vadd.xlane.f32.xlu0 %v1879
  %v1881 = vpop.xlane.xlu0 %1880
  %v1882 = vsel %vm1665, %v1811, 0.0
  %1883 = vadd.xlane.f32.xlu0 %v1882
  %v1884 = vpop.xlane.xlu0 %1883
  %v1885 = vsel %vm1665, %v1813, 0.0
  %1886 = vadd.xlane.f32.xlu0 %v1885
  %v1887 = vpop.xlane.xlu0 %1886
  %v1888 = vsel %vm1665, %v1815, 0.0
  %1889 = vadd.xlane.f32.xlu0 %v1888
  %v1890 = vpop.xlane.xlu0 %1889
  %v1891 = vrcp.pop %v1818
  %v1892 = vrcp.pop %v1821
  %v1893 = vrcp.pop %v1824
  %v1894 = vrcp.pop %v1827
  %v1895 = vrcp.pop %v1830
  %v1896 = vrcp.pop %v1833
  %v1897 = vrcp.pop %v1836
  %v1898 = vrcp.pop %v1839
  %v1899 = vrcp.pop %v1842
  %v1900 = vrcp.pop %v1845
  %v1901 = vrcp.pop %v1848
  %v1902 = vrcp.pop %v1851
  %v1903 = vrcp.pop %v1854
  %v1904 = vrcp.pop %v1857
  %v1905 = vrcp.pop %v1860
  %v1906 = vrcp.pop %v1863
  %v1907 = vrcp.pop %v1866
  %v1908 = vrcp.pop %v1869
  %v1909 = vrcp.pop %v1872
  %v1910 = vrcp.pop %v1875
  %v1911 = vrcp.pop %v1878
  %v1912 = vrcp.pop %v1881
  %v1913 = vrcp.pop %v1884
  %v1914 = vrcp.pop %v1887
  %v1915 = vrcp.pop %v1890
  %v1916 = vmul.f32 %v1767, %v1891
  %v1917 = vmul.f32 %v1769, %v1892
  %v1918 = vmul.f32 %v1771, %v1893
  %v1919 = vmul.f32 %v1773, %v1894
  %v1920 = vmul.f32 %v1775, %v1895
  %v1921 = vmul.f32 %v1777, %v1896
  %v1922 = vmul.f32 %v1779, %v1897
  %v1923 = vmul.f32 %v1781, %v1898
  %v1924 = vmul.f32 %v1783, %v1899
  %v1925 = vmul.f32 %v1785, %v1900
  %v1926 = vmul.f32 %v1787, %v1901
  %v1927 = vmul.f32 %v1789, %v1902
  %v1928 = vmul.f32 %v1791, %v1903
  %v1929 = vmul.f32 %v1793, %v1904
  %v1930 = vmul.f32 %v1795, %v1905
  %v1931 = vmul.f32 %v1797, %v1906
  %v1932 = vmul.f32 %v1799, %v1907
  %v1933 = vmul.f32 %v1801, %v1908
  %v1934 = vmul.f32 %v1803, %v1909
  %v1935 = vmul.f32 %v1805, %v1910
  %v1936 = vmul.f32 %v1807, %v1911
  %v1937 = vmul.f32 %v1809, %v1912
  %v1938 = vmul.f32 %v1811, %v1913
  %v1939 = vmul.f32 %v1813, %v1914
  %v1940 = vmul.f32 %v1815, %v1915
  %1941 = vst.msk [vmem:[%s2] sm:$0xff] %vm1665, %v1916
  %1942 = vst.msk [vmem:[%s2 + $0x8] sm:$0xff] %vm1665, %v1917
  %1943 = vst.msk [vmem:[%s2 + $0x10] sm:$0xff] %vm1665, %v1918
  %1944 = vst.msk [vmem:[%s2 + $0x18] sm:$0xff] %vm1665, %v1919
  %1945 = vst.msk [vmem:[%s2 + $0x20] sm:$0xff] %vm1665, %v1920
  %1946 = vst.msk [vmem:[%s2 + $0x28] sm:$0xff] %vm1665, %v1921
  %1947 = vst.msk [vmem:[%s2 + $0x30] sm:$0xff] %vm1665, %v1922
  %1948 = vst.msk [vmem:[%s2 + $0x38] sm:$0xff] %vm1665, %v1923
  %1949 = vst.msk [vmem:[%s2 + $0x40] sm:$0xff] %vm1665, %v1924
  %1950 = vst.msk [vmem:[%s2 + $0x48] sm:$0xff] %vm1665, %v1925
  %1951 = vst.msk [vmem:[%s2 + $0x50] sm:$0xff] %vm1665, %v1926
  %1952 = vst.msk [vmem:[%s2 + $0x58] sm:$0xff] %vm1665, %v1927
  %1953 = vst.msk [vmem:[%s2 + $0x60] sm:$0xff] %vm1665, %v1928
  %1954 = vst.msk [vmem:[%s2 + $0x68] sm:$0xff] %vm1665, %v1929
  %1955 = vst.msk [vmem:[%s2 + $0x70] sm:$0xff] %vm1665, %v1930
  %1956 = vst.msk [vmem:[%s2 + $0x78] sm:$0xff] %vm1665, %v1931
  %1957 = vst.msk [vmem:[%s2 + $0x80] sm:$0xff] %vm1665, %v1932
  %1958 = vst.msk [vmem:[%s2 + $0x88] sm:$0xff] %vm1665, %v1933
  %1959 = vst.msk [vmem:[%s2 + $0x90] sm:$0xff] %vm1665, %v1934
  %1960 = vst.msk [vmem:[%s2 + $0x98] sm:$0xff] %vm1665, %v1935
  %1961 = vst.msk [vmem:[%s2 + $0xa0] sm:$0xff] %vm1665, %v1936
  %1962 = vst.msk [vmem:[%s2 + $0xa8] sm:$0xff] %vm1665, %v1937
  %1963 = vst.msk [vmem:[%s2 + $0xb0] sm:$0xff] %vm1665, %v1938
  %1964 = vst.msk [vmem:[%s2 + $0xb8] sm:$0xff] %vm1665, %v1939
  %1965 = vst.msk [vmem:[%s2 + $0xc0] sm:$0xff] %vm1665, %v1940
  // Predicated region
  $region10: #{tpu_custom_call.1} parent=0 // pred_check
    _
  $region11: #{tpu_custom_call.1} parent=0 // pred_check_branch
    %1967 = sbr.rel (0) target = $region13
  $region12: #{tpu_custom_call.1} parent=0 // pred_region
    _
  $region13: #{tpu_custom_call.1} parent=0 // pred_fallthru
    _
  // Predicated region
  $region14: #{tpu_custom_call.1} parent=0 // pred_check
    _
  $region15: #{tpu_custom_call.1} parent=0 // pred_check_branch
    %1969 = sbr.rel (0) target = $region17
  $region16: #{tpu_custom_call.1} parent=0 // pred_region
    _
  $region17: #{tpu_custom_call.1} parent=0 // pred_fallthru
    _

</llo_original>
